<compile_context>
chip_gen: v6e
topology: v6e:2x2x1
jax: 0.10.0
libtpu: 0.0.40
codegen_flags: <defaults>
</compile_context>

<pallas_src>
import math
from functools import partial

import jax
import jax.numpy as jnp
from jax import lax
from jax.experimental import pallas as pl
from jax.experimental.pallas import tpu as pltpu

EPS = 1e-5  # PyTorch nn.LayerNorm default eps


def _layernorm(x, gamma, beta):
    mu = jnp.mean(x, axis=-1, keepdims=True)
    var = jnp.mean((x - mu) ** 2, axis=-1, keepdims=True)
    return (x - mu) * lax.rsqrt(var + EPS) * gamma + beta


def _vmem_limit_bytes():
    # Generation-aware scoped-VMEM budget: ~75% of physical (96 MiB on
    # v5e/v6e's 128 MiB, 48 MiB on v7x's 64 MiB), capped at 100 MiB.
    try:
        cap = pltpu.get_tpu_info().vmem_capacity_bytes
    except Exception:
        cap = 64 * 1024 * 1024
    return min(int(cap) * 3 // 4, 100 * 1024 * 1024)


# ---------------------------------------------------------------------------
# Whole encoder stack: grid = (batch, layer).  The (T, C) activation is carried
# in a VMEM scratch across the layer axis; layer weights (stacked on a leading
# L axis) are streamed per layer step by the BlockSpec pipeline.
# ---------------------------------------------------------------------------
def encoder_stack_kernel(x_ref, mask_ref,
                         g1_ref, be1_ref, wqkv_ref, bqkv_ref, wo_ref, bo_ref,
                         g2_ref, be2_ref, w1_ref, bf1_ref, w2_ref, bf2_ref,
                         o_ref, x_vmem, *, num_heads, head_dim):
    l = pl.program_id(1)
    T, C = x_vmem.shape

    @pl.when(l == 0)
    def _():                              # load this batch row's activations once
        x_vmem[...] = x_ref[0]

    x = x_vmem[...]                       # (T, C) f32 carry
    mrow = mask_ref[0]                    # (1, T) key mask (1 = attend, 0 = pad)
    # Additive key-mask bias, built once per step, kept in f32 (do NOT move to
    # bf16: -1e30 would overflow).  Mirrors masked_fill(mask == 0, -inf).
    bias = jnp.where(mrow > 0.0, 0.0, -1e30).reshape(1, 1, T)

    # --- self-attention sublayer: x = x + attn(norm1(x)) ---
    xn = _layernorm(x, g1_ref[0], be1_ref[0])
    qkv = (jnp.dot(xn.astype(jnp.bfloat16), wqkv_ref[0],
                   preferred_element_type=jnp.float32)
           + bqkv_ref[0])                                        # (T, 3C) f32

    def split_heads(x2d):
        # (T, C) f32 -> (H, T, D); reshape/transpose done in f32, then a single
        # bf16 cast per tensor (no per-head sub-slice casts).
        return jnp.swapaxes(
            x2d.reshape(T, num_heads, head_dim), 0, 1).astype(jnp.bfloat16)

    # 1/sqrt(head_dim) is already folded into the Q weights (init_params).
    q = split_heads(qkv[:, 0 * C:1 * C])
    k = split_heads(qkv[:, 1 * C:2 * C])
    v = split_heads(qkv[:, 2 * C:3 * C])

    s = jnp.einsum('hqd,hkd->hqk', q, k,
                   preferred_element_type=jnp.float32)           # (H, T, T) f32
    s = s + bias
    s = s - jnp.max(s, axis=-1, keepdims=True)
    p = jnp.exp(s)
    attn = p * pl.reciprocal(jnp.sum(p, axis=-1, keepdims=True), approx=True)
    ctx = jnp.einsum('hqk,hkd->hqd', attn.astype(jnp.bfloat16), v,
                     preferred_element_type=jnp.float32)         # (H, T, D) f32
    ctx = jnp.swapaxes(ctx, 0, 1).reshape(T, C).astype(jnp.bfloat16)

    attn_out = (jnp.dot(ctx, wo_ref[0], preferred_element_type=jnp.float32)
                + bo_ref[0])
    x = x + attn_out

    # --- feed-forward sublayer: x = x + ff(norm2(x)) ---
    xn2 = _layernorm(x, g2_ref[0], be2_ref[0])
    hid = jnp.maximum(
        jnp.dot(xn2.astype(jnp.bfloat16), w1_ref[0],
                preferred_element_type=jnp.float32) + bf1_ref[0], 0.0)
    ff = (jnp.dot(hid.astype(jnp.bfloat16), w2_ref[0],
                  preferred_element_type=jnp.float32) + bf2_ref[0])
    x = x + ff

    x_vmem[...] = x                       # carry to next layer step

    @pl.when(l == pl.num_programs(1) - 1)
    def _():
        o_ref[0] = x


def encoder_stack(x, mask3, stack, num_heads, head_dim, vmem_limit):
    B, T, C = x.shape
    order = ['g1', 'be1', 'wqkv', 'bqkv', 'wo', 'bo',
             'g2', 'be2', 'w1', 'bf1', 'w2', 'bf2']
    params = [stack[n] for n in order]
    L = stack['wqkv'].shape[0]

    def layer_spec(p):
        # One layer's full parameter tensor per step; indexed by the layer axis.
        return pl.BlockSpec((1,) + p.shape[1:],
                            lambda b, l: (l,) + (0,) * (p.ndim - 1))

    kern = partial(encoder_stack_kernel, num_heads=num_heads, head_dim=head_dim)
    return pl.pallas_call(
        kern,
        out_shape=jax.ShapeDtypeStruct((B, T, C), jnp.float32),
        grid=(B, L),
        in_specs=[pl.BlockSpec((1, T, C), lambda b, l: (b, 0, 0)),
                  pl.BlockSpec((1, 1, T), lambda b, l: (b, 0, 0))]
                 + [layer_spec(p) for p in params],
        out_specs=pl.BlockSpec((1, T, C), lambda b, l: (b, 0, 0)),
        scratch_shapes=[pltpu.VMEM((T, C), jnp.float32)],
        compiler_params=pltpu.CompilerParams(
            dimension_semantics=("parallel", "arbitrary"),
            vmem_limit_bytes=vmem_limit),
    )(x, mask3, *params)


# ---------------------------------------------------------------------------
# Final LayerNorm + classifier; only the (B, C) CLS slice enters the kernel.
# ---------------------------------------------------------------------------
def head_kernel(cls_ref, g_ref, be_ref, wc_ref, bc_ref, o_ref):
    xn = _layernorm(cls_ref[...], g_ref[...], be_ref[...])      # (B, C) f32
    o_ref[...] = (jnp.dot(xn.astype(jnp.bfloat16), wc_ref[...],
                          preferred_element_type=jnp.float32) + bc_ref[...])


def head(cls_tokens, g, be, wc, bc, num_classes):
    B = cls_tokens.shape[0]
    return pl.pallas_call(
        head_kernel,
        out_shape=jax.ShapeDtypeStruct((B, num_classes), jnp.float32),
    )(cls_tokens, g, be, wc, bc)


# ---------------------------------------------------------------------------
# Parameters + full forward pass
# ---------------------------------------------------------------------------
def init_params(key, *, vocab_size, embed_dim, num_heads, ff_dim, num_layers,
                max_len, num_classes):
    C = embed_dim
    head_dim = C // num_heads
    kit = iter(jax.random.split(key, 8))

    def wf32(shape, std=0.02):
        return jax.random.normal(next(kit), shape, jnp.float32) * std

    # Fold the 1/sqrt(head_dim) attention scale into the Q projection columns
    # (zero runtime cost; at weight-load time this is W_q /= sqrt(d), b_q /= sqrt(d)).
    scale = 1.0 / math.sqrt(head_dim)
    wqkv = wf32((num_layers, C, 3 * C)).at[..., 0:C].multiply(scale)

    return {
        'token_emb': wf32((vocab_size, C)),
        'pos_emb': wf32((max_len, C)),
        'norm_g': jnp.ones((1, C), jnp.float32),
        'norm_b': jnp.zeros((1, C), jnp.float32),
        'cls_w': wf32((C, num_classes)).astype(jnp.bfloat16),
        'cls_b': jnp.zeros((1, num_classes), jnp.float32),
        'stack': {
            'g1': jnp.ones((num_layers, 1, C), jnp.float32),
            'be1': jnp.zeros((num_layers, 1, C), jnp.float32),
            'wqkv': wqkv.astype(jnp.bfloat16),                  # fused Q/K/V
            'bqkv': jnp.zeros((num_layers, 1, 3 * C), jnp.float32),
            'wo': wf32((num_layers, C, C)).astype(jnp.bfloat16),
            'bo': jnp.zeros((num_layers, 1, C), jnp.float32),
            'g2': jnp.ones((num_layers, 1, C), jnp.float32),
            'be2': jnp.zeros((num_layers, 1, C), jnp.float32),
            'w1': wf32((num_layers, C, ff_dim)).astype(jnp.bfloat16),
            'bf1': jnp.zeros((num_layers, 1, ff_dim), jnp.float32),
            'w2': wf32((num_layers, ff_dim, C)).astype(jnp.bfloat16),
            'bf2': jnp.zeros((num_layers, 1, C), jnp.float32),
        },
    }


def bert_forward(params, input_ids, attention_mask, *, num_heads, head_dim,
                 num_classes, vmem_limit):
    B, T = input_ids.shape
    # Embedding gathers are glue (plain JAX); the hot path runs in Pallas.
    positions = jnp.arange(T)
    x = (params['token_emb'][input_ids]
         + params['pos_emb'][positions][None, :, :]).astype(jnp.float32)
    mask3 = attention_mask.astype(jnp.float32)[:, None, :]      # (B, 1, T)
    x = encoder_stack(x, mask3, params['stack'], num_heads, head_dim, vmem_limit)
    cls_tokens = x[:, 0, :]                                     # (B, C) only
    return head(cls_tokens, params['norm_g'], params['norm_b'],
                params['cls_w'], params['cls_b'], num_classes)


if __name__ == "__main__":
    # Small shapes consistent with the module's forward.
    B, T = 2, 8
    VOCAB, EMBED, HEADS, FF, LAYERS, MAX_LEN, NUM_CLASSES = 50, 32, 4, 64, 2, 16, 3
    HEAD_DIM = EMBED // HEADS

    key = jax.random.PRNGKey(0)
    k_param, k_ids = jax.random.split(key)
    params = init_params(k_param, vocab_size=VOCAB, embed_dim=EMBED,
                         num_heads=HEADS, ff_dim=FF, num_layers=LAYERS,
                         max_len=MAX_LEN, num_classes=NUM_CLASSES)

    input_ids = jax.random.randint(k_ids, (B, T), 0, VOCAB, dtype=jnp.int32)
    attention_mask = jnp.ones((B, T), jnp.float32)
    attention_mask = attention_mask.at[1, 6:].set(0.0)  # pad the tail of row 1

    logits = bert_forward(params, input_ids, attention_mask,
                          num_heads=HEADS, head_dim=HEAD_DIM,
                          num_classes=NUM_CLASSES,
                          vmem_limit=_vmem_limit_bytes())
    logits = jax.block_until_ready(logits)
    assert logits.shape == (B, NUM_CLASSES)
    assert bool(jnp.all(jnp.isfinite(logits)))
    print("KERNEL_OK")
</pallas_src>

<mosaic_0001>
module attributes {stable_mosaic.version = 11 : i64} {
  func.func @encoder_stack_kernel(%arg0: i32, %arg1: i32, %arg2: memref<1x8x32xf32, #tpu.memory_space<vmem>>, %arg3: memref<1x1x8xf32, #tpu.memory_space<vmem>>, %arg4: memref<1x1x32xf32, #tpu.memory_space<vmem>>, %arg5: memref<1x1x32xf32, #tpu.memory_space<vmem>>, %arg6: memref<1x32x96xbf16, #tpu.memory_space<vmem>>, %arg7: memref<1x1x96xf32, #tpu.memory_space<vmem>>, %arg8: memref<1x32x32xbf16, #tpu.memory_space<vmem>>, %arg9: memref<1x1x32xf32, #tpu.memory_space<vmem>>, %arg10: memref<1x1x32xf32, #tpu.memory_space<vmem>>, %arg11: memref<1x1x32xf32, #tpu.memory_space<vmem>>, %arg12: memref<1x32x64xbf16, #tpu.memory_space<vmem>>, %arg13: memref<1x1x64xf32, #tpu.memory_space<vmem>>, %arg14: memref<1x64x32xbf16, #tpu.memory_space<vmem>>, %arg15: memref<1x1x32xf32, #tpu.memory_space<vmem>>, %arg16: memref<1x8x32xf32, #tpu.memory_space<vmem>>, %arg17: memref<8x32xf32, #tpu.memory_space<vmem>>) attributes {dimension_semantics = [#tpu.dimension_semantics<parallel>, #tpu.dimension_semantics<arbitrary>], iteration_bounds = array<i64: 2, 2>, scalar_prefetch = 0 : i64, scratch_operands = 1 : i64, tpu.core_type = #tpu.core_type<tc>, window_params = [{transform_indices = @transform_0, window_bounds = array<i64: 1, 8, 32>}, {transform_indices = @transform_1, window_bounds = array<i64: 1, 1, 8>}, {transform_indices = @transform_2, window_bounds = array<i64: 1, 1, 32>}, {transform_indices = @transform_3, window_bounds = array<i64: 1, 1, 32>}, {transform_indices = @transform_4, window_bounds = array<i64: 1, 32, 96>}, {transform_indices = @transform_5, window_bounds = array<i64: 1, 1, 96>}, {transform_indices = @transform_6, window_bounds = array<i64: 1, 32, 32>}, {transform_indices = @transform_7, window_bounds = array<i64: 1, 1, 32>}, {transform_indices = @transform_8, window_bounds = array<i64: 1, 1, 32>}, {transform_indices = @transform_9, window_bounds = array<i64: 1, 1, 32>}, {transform_indices = @transform_10, window_bounds = array<i64: 1, 32, 64>}, {transform_indices = @transform_11, window_bounds = array<i64: 1, 1, 64>}, {transform_indices = @transform_12, window_bounds = array<i64: 1, 64, 32>}, {transform_indices = @transform_13, window_bounds = array<i64: 1, 1, 32>}, {transform_indices = @transform_14, window_bounds = array<i64: 1, 8, 32>}]} {
    %c0_i32 = arith.constant 0 : i32
    %0 = arith.cmpi eq, %arg1, %c0_i32 : i32
    %1 = arith.extui %0 : i1 to i32
    %c0_i32_0 = arith.constant 0 : i32
    %2 = arith.cmpi ne, %1, %c0_i32_0 : i32
    scf.if %2 {
      %c0_65 = arith.constant 0 : index
      %c0_66 = arith.constant 0 : index
      %c0_67 = arith.constant 0 : index
      %133 = vector.load %arg2[%c0_65, %c0_66, %c0_67] : memref<1x8x32xf32, #tpu.memory_space<vmem>>, vector<1x8x32xf32>
      %134 = vector.shape_cast %133 : vector<1x8x32xf32> to vector<8x32xf32>
      %c0_68 = arith.constant 0 : index
      %c0_69 = arith.constant 0 : index
      %135 = vector.load %arg17[%c0_68, %c0_69] : memref<8x32xf32, #tpu.memory_space<vmem>>, vector<8x32xf32>
      tpu.vector_store %arg17[%c0_68, %c0_69], %134 {strides = array<i32>} : memref<8x32xf32, #tpu.memory_space<vmem>>, vector<8x32xf32>,
    } else {
    }
    %c0 = arith.constant 0 : index
    %c0_1 = arith.constant 0 : index
    %3 = vector.load %arg17[%c0, %c0_1] : memref<8x32xf32, #tpu.memory_space<vmem>>, vector<8x32xf32>
    %c0_2 = arith.constant 0 : index
    %c0_3 = arith.constant 0 : index
    %c0_4 = arith.constant 0 : index
    %4 = vector.load %arg3[%c0_2, %c0_3, %c0_4] : memref<1x1x8xf32, #tpu.memory_space<vmem>>, vector<1x1x8xf32>
    %5 = vector.shape_cast %4 : vector<1x1x8xf32> to vector<1x8xf32>
    %cst = arith.constant 0.000000e+00 : f32
    %6 = vector.broadcast %cst : f32 to vector<1x8xf32>
    %7 = arith.cmpf ogt, %5, %6 : vector<1x8xf32>
    %cst_5 = arith.constant 0.000000e+00 : f32
    %cst_6 = arith.constant -1.000000e+30 : f32
    %8 = vector.broadcast %cst_5 : f32 to vector<1x8xf32>
    %9 = vector.broadcast %cst_6 : f32 to vector<1x8xf32>
    %10 = arith.select %7, %8, %9 : vector<1x8xi1>, vector<1x8xf32>
    %11 = vector.shape_cast %10 : vector<1x8xf32> to vector<1x1x8xf32>
    %c0_7 = arith.constant 0 : index
    %c0_8 = arith.constant 0 : index
    %c0_9 = arith.constant 0 : index
    %12 = vector.load %arg4[%c0_7, %c0_8, %c0_9] : memref<1x1x32xf32, #tpu.memory_space<vmem>>, vector<1x1x32xf32>
    %13 = vector.shape_cast %12 : vector<1x1x32xf32> to vector<1x32xf32>
    %c0_10 = arith.constant 0 : index
    %c0_11 = arith.constant 0 : index
    %c0_12 = arith.constant 0 : index
    %14 = vector.load %arg5[%c0_10, %c0_11, %c0_12] : memref<1x1x32xf32, #tpu.memory_space<vmem>>, vector<1x1x32xf32>
    %15 = vector.shape_cast %14 : vector<1x1x32xf32> to vector<1x32xf32>
    %cst_13 = arith.constant dense<0.000000e+00> : vector<8xf32>
    %16 = vector.multi_reduction <add>, %3, %cst_13 [1] : vector<8x32xf32> to vector<8xf32>
    %17 = vector.shape_cast %16 : vector<8xf32> to vector<8x1xf32>
    %cst_14 = arith.constant 3.200000e+01 : f32
    %18 = vector.broadcast %cst_14 : f32 to vector<8x1xf32>
    %19 = arith.divf %17, %18 : vector<8x1xf32>
    %20 = vector.broadcast %19 : vector<8x1xf32> to vector<8x32xf32>
    %21 = arith.subf %3, %20 : vector<8x32xf32>
    %22 = arith.mulf %21, %21 : vector<8x32xf32>
    %cst_15 = arith.constant dense<0.000000e+00> : vector<8xf32>
    %23 = vector.multi_reduction <add>, %22, %cst_15 [1] : vector<8x32xf32> to vector<8xf32>
    %24 = vector.shape_cast %23 : vector<8xf32> to vector<8x1xf32>
    %cst_16 = arith.constant 3.200000e+01 : f32
    %25 = vector.broadcast %cst_16 : f32 to vector<8x1xf32>
    %26 = arith.divf %24, %25 : vector<8x1xf32>
    %27 = vector.broadcast %19 : vector<8x1xf32> to vector<8x32xf32>
    %28 = arith.subf %3, %27 : vector<8x32xf32>
    %cst_17 = arith.constant 9.99999974E-6 : f32
    %29 = vector.broadcast %cst_17 : f32 to vector<8x1xf32>
    %30 = arith.addf %26, %29 : vector<8x1xf32>
    %31 = math.rsqrt %30 : vector<8x1xf32>
    %32 = vector.broadcast %31 : vector<8x1xf32> to vector<8x32xf32>
    %33 = arith.mulf %28, %32 : vector<8x32xf32>
    %34 = vector.broadcast %13 : vector<1x32xf32> to vector<8x32xf32>
    %35 = arith.mulf %33, %34 : vector<8x32xf32>
    %36 = vector.broadcast %15 : vector<1x32xf32> to vector<8x32xf32>
    %37 = arith.addf %35, %36 : vector<8x32xf32>
    %38 = arith.truncf %37 : vector<8x32xf32> to vector<8x32xbf16>
    %c0_18 = arith.constant 0 : index
    %c0_19 = arith.constant 0 : index
    %c0_20 = arith.constant 0 : index
    %39 = vector.load %arg6[%c0_18, %c0_19, %c0_20] : memref<1x32x96xbf16, #tpu.memory_space<vmem>>, vector<1x32x96xbf16>
    %40 = vector.shape_cast %39 : vector<1x32x96xbf16> to vector<32x96xbf16>
    %cst_21 = arith.constant dense<0.000000e+00> : vector<8x96xf32>
    %41 = tpu.matmul %38, %40, %cst_21 {dimension_numbers = #tpu.dot_dimension_numbers<[1], [0], [0], [1], [0, 0, 1, 1], [], []>} : vector<8x32xbf16>, vector<32x96xbf16>, vector<8x96xf32> -> vector<8x96xf32>
    %c0_22 = arith.constant 0 : index
    %c0_23 = arith.constant 0 : index
    %c0_24 = arith.constant 0 : index
    %42 = vector.load %arg7[%c0_22, %c0_23, %c0_24] : memref<1x1x96xf32, #tpu.memory_space<vmem>>, vector<1x1x96xf32>
    %43 = vector.shape_cast %42 : vector<1x1x96xf32> to vector<1x96xf32>
    %44 = vector.broadcast %43 : vector<1x96xf32> to vector<8x96xf32>
    %45 = arith.addf %41, %44 : vector<8x96xf32>
    %46 = vector.extract_strided_slice %45 {offsets = [0, 0], sizes = [8, 32], strides = [1, 1]} : vector<8x96xf32> to vector<8x32xf32>
    %47 = vector.shape_cast %46 : vector<8x32xf32> to vector<8x4x8xf32>
    %48 = tpu.transpose %47, [1, 0, 2] : vector<8x4x8xf32> -> vector<4x8x8xf32>
    %49 = arith.truncf %48 : vector<4x8x8xf32> to vector<4x8x8xbf16>
    %50 = vector.extract_strided_slice %45 {offsets = [0, 32], sizes = [8, 32], strides = [1, 1]} : vector<8x96xf32> to vector<8x32xf32>
    %51 = vector.shape_cast %50 : vector<8x32xf32> to vector<8x4x8xf32>
    %52 = tpu.transpose %51, [1, 0, 2] : vector<8x4x8xf32> -> vector<4x8x8xf32>
    %53 = arith.truncf %52 : vector<4x8x8xf32> to vector<4x8x8xbf16>
    %54 = vector.extract_strided_slice %45 {offsets = [0, 64], sizes = [8, 32], strides = [1, 1]} : vector<8x96xf32> to vector<8x32xf32>
    %55 = vector.shape_cast %54 : vector<8x32xf32> to vector<8x4x8xf32>
    %56 = tpu.transpose %55, [1, 0, 2] : vector<8x4x8xf32> -> vector<4x8x8xf32>
    %57 = arith.truncf %56 : vector<4x8x8xf32> to vector<4x8x8xbf16>
    "tpu.trace_start"() <{level = 10 : i32, message = "hqd,hkd->hqk"}> : () -> ()
    %cst_25 = arith.constant dense<0.000000e+00> : vector<4x8x8xf32>
    %58 = tpu.matmul %49, %53, %cst_25 {dimension_numbers = #tpu.dot_dimension_numbers<[2], [2], [1], [1], [0, 0, 0, 1, 1, 1], [0], [0]>} : vector<4x8x8xbf16>, vector<4x8x8xbf16>, vector<4x8x8xf32> -> vector<4x8x8xf32>
    "tpu.trace_stop"() : () -> ()
    %59 = vector.broadcast %11 : vector<1x1x8xf32> to vector<4x8x8xf32>
    %60 = arith.addf %58, %59 : vector<4x8x8xf32>
    %cst_26 = arith.constant dense<0xFF800000> : vector<4x8xf32>
    %61 = vector.multi_reduction <maximumf>, %60, %cst_26 [2] : vector<4x8x8xf32> to vector<4x8xf32>
    %62 = vector.shape_cast %61 : vector<4x8xf32> to vector<4x8x1xf32>
    %63 = vector.broadcast %62 : vector<4x8x1xf32> to vector<4x8x8xf32>
    %64 = arith.subf %60, %63 : vector<4x8x8xf32>
    %65 = math.exp %64 : vector<4x8x8xf32>
    %cst_27 = arith.constant dense<0.000000e+00> : vector<4x8xf32>
    %66 = vector.multi_reduction <add>, %65, %cst_27 [2] : vector<4x8x8xf32> to vector<4x8xf32>
    %67 = vector.shape_cast %66 : vector<4x8xf32> to vector<4x8x1xf32>
    %68 = tpu.reciprocal %67 {approx = true} : vector<4x8x1xf32> -> vector<4x8x1xf32>
    %69 = vector.broadcast %68 : vector<4x8x1xf32> to vector<4x8x8xf32>
    %70 = arith.mulf %65, %69 : vector<4x8x8xf32>
    %71 = arith.truncf %70 : vector<4x8x8xf32> to vector<4x8x8xbf16>
    "tpu.trace_start"() <{level = 10 : i32, message = "hqk,hkd->hqd"}> : () -> ()
    %cst_28 = arith.constant dense<0.000000e+00> : vector<4x8x8xf32>
    %72 = tpu.matmul %71, %57, %cst_28 {dimension_numbers = #tpu.dot_dimension_numbers<[2], [1], [1], [2], [0, 0, 0, 1, 1, 2], [0], [0]>} : vector<4x8x8xbf16>, vector<4x8x8xbf16>, vector<4x8x8xf32> -> vector<4x8x8xf32>
    "tpu.trace_stop"() : () -> ()
    %73 = tpu.transpose %72, [1, 0, 2] : vector<4x8x8xf32> -> vector<8x4x8xf32>
    %74 = vector.shape_cast %73 : vector<8x4x8xf32> to vector<8x32xf32>
    %75 = arith.truncf %74 : vector<8x32xf32> to vector<8x32xbf16>
    %c0_29 = arith.constant 0 : index
    %c0_30 = arith.constant 0 : index
    %c0_31 = arith.constant 0 : index
    %76 = vector.load %arg8[%c0_29, %c0_30, %c0_31] : memref<1x32x32xbf16, #tpu.memory_space<vmem>>, vector<1x32x32xbf16>
    %77 = vector.shape_cast %76 : vector<1x32x32xbf16> to vector<32x32xbf16>
    %cst_32 = arith.constant dense<0.000000e+00> : vector<8x32xf32>
    %78 = tpu.matmul %75, %77, %cst_32 {dimension_numbers = #tpu.dot_dimension_numbers<[1], [0], [0], [1], [0, 0, 1, 1], [], []>} : vector<8x32xbf16>, vector<32x32xbf16>, vector<8x32xf32> -> vector<8x32xf32>
    %c0_33 = arith.constant 0 : index
    %c0_34 = arith.constant 0 : index
    %c0_35 = arith.constant 0 : index
    %79 = vector.load %arg9[%c0_33, %c0_34, %c0_35] : memref<1x1x32xf32, #tpu.memory_space<vmem>>, vector<1x1x32xf32>
    %80 = vector.shape_cast %79 : vector<1x1x32xf32> to vector<1x32xf32>
    %81 = vector.broadcast %80 : vector<1x32xf32> to vector<8x32xf32>
    %82 = arith.addf %78, %81 : vector<8x32xf32>
    %83 = arith.addf %3, %82 : vector<8x32xf32>
    %c0_36 = arith.constant 0 : index
    %c0_37 = arith.constant 0 : index
    %c0_38 = arith.constant 0 : index
    %84 = vector.load %arg10[%c0_36, %c0_37, %c0_38] : memref<1x1x32xf32, #tpu.memory_space<vmem>>, vector<1x1x32xf32>
    %85 = vector.shape_cast %84 : vector<1x1x32xf32> to vector<1x32xf32>
    %c0_39 = arith.constant 0 : index
    %c0_40 = arith.constant 0 : index
    %c0_41 = arith.constant 0 : index
    %86 = vector.load %arg11[%c0_39, %c0_40, %c0_41] : memref<1x1x32xf32, #tpu.memory_space<vmem>>, vector<1x1x32xf32>
    %87 = vector.shape_cast %86 : vector<1x1x32xf32> to vector<1x32xf32>
    %cst_42 = arith.constant dense<0.000000e+00> : vector<8xf32>
    %88 = vector.multi_reduction <add>, %83, %cst_42 [1] : vector<8x32xf32> to vector<8xf32>
    %89 = vector.shape_cast %88 : vector<8xf32> to vector<8x1xf32>
    %cst_43 = arith.constant 3.200000e+01 : f32
    %90 = vector.broadcast %cst_43 : f32 to vector<8x1xf32>
    %91 = arith.divf %89, %90 : vector<8x1xf32>
    %92 = vector.broadcast %91 : vector<8x1xf32> to vector<8x32xf32>
    %93 = arith.subf %83, %92 : vector<8x32xf32>
    %94 = arith.mulf %93, %93 : vector<8x32xf32>
    %cst_44 = arith.constant dense<0.000000e+00> : vector<8xf32>
    %95 = vector.multi_reduction <add>, %94, %cst_44 [1] : vector<8x32xf32> to vector<8xf32>
    %96 = vector.shape_cast %95 : vector<8xf32> to vector<8x1xf32>
    %cst_45 = arith.constant 3.200000e+01 : f32
    %97 = vector.broadcast %cst_45 : f32 to vector<8x1xf32>
    %98 = arith.divf %96, %97 : vector<8x1xf32>
    %99 = vector.broadcast %91 : vector<8x1xf32> to vector<8x32xf32>
    %100 = arith.subf %83, %99 : vector<8x32xf32>
    %cst_46 = arith.constant 9.99999974E-6 : f32
    %101 = vector.broadcast %cst_46 : f32 to vector<8x1xf32>
    %102 = arith.addf %98, %101 : vector<8x1xf32>
    %103 = math.rsqrt %102 : vector<8x1xf32>
    %104 = vector.broadcast %103 : vector<8x1xf32> to vector<8x32xf32>
    %105 = arith.mulf %100, %104 : vector<8x32xf32>
    %106 = vector.broadcast %85 : vector<1x32xf32> to vector<8x32xf32>
    %107 = arith.mulf %105, %106 : vector<8x32xf32>
    %108 = vector.broadcast %87 : vector<1x32xf32> to vector<8x32xf32>
    %109 = arith.addf %107, %108 : vector<8x32xf32>
    %110 = arith.truncf %109 : vector<8x32xf32> to vector<8x32xbf16>
    %c0_47 = arith.constant 0 : index
    %c0_48 = arith.constant 0 : index
    %c0_49 = arith.constant 0 : index
    %111 = vector.load %arg12[%c0_47, %c0_48, %c0_49] : memref<1x32x64xbf16, #tpu.memory_space<vmem>>, vector<1x32x64xbf16>
    %112 = vector.shape_cast %111 : vector<1x32x64xbf16> to vector<32x64xbf16>
    %cst_50 = arith.constant dense<0.000000e+00> : vector<8x64xf32>
    %113 = tpu.matmul %110, %112, %cst_50 {dimension_numbers = #tpu.dot_dimension_numbers<[1], [0], [0], [1], [0, 0, 1, 1], [], []>} : vector<8x32xbf16>, vector<32x64xbf16>, vector<8x64xf32> -> vector<8x64xf32>
    %c0_51 = arith.constant 0 : index
    %c0_52 = arith.constant 0 : index
    %c0_53 = arith.constant 0 : index
    %114 = vector.load %arg13[%c0_51, %c0_52, %c0_53] : memref<1x1x64xf32, #tpu.memory_space<vmem>>, vector<1x1x64xf32>
    %115 = vector.shape_cast %114 : vector<1x1x64xf32> to vector<1x64xf32>
    %116 = vector.broadcast %115 : vector<1x64xf32> to vector<8x64xf32>
    %117 = arith.addf %113, %116 : vector<8x64xf32>
    %cst_54 = arith.constant 0.000000e+00 : f32
    %118 = vector.broadcast %cst_54 : f32 to vector<8x64xf32>
    %119 = arith.maximumf %117, %118 : vector<8x64xf32>
    %120 = arith.truncf %119 : vector<8x64xf32> to vector<8x64xbf16>
    %c0_55 = arith.constant 0 : index
    %c0_56 = arith.constant 0 : index
    %c0_57 = arith.constant 0 : index
    %121 = vector.load %arg14[%c0_55, %c0_56, %c0_57] : memref<1x64x32xbf16, #tpu.memory_space<vmem>>, vector<1x64x32xbf16>
    %122 = vector.shape_cast %121 : vector<1x64x32xbf16> to vector<64x32xbf16>
    %cst_58 = arith.constant dense<0.000000e+00> : vector<8x32xf32>
    %123 = tpu.matmul %120, %122, %cst_58 {dimension_numbers = #tpu.dot_dimension_numbers<[1], [0], [0], [1], [0, 0, 1, 1], [], []>} : vector<8x64xbf16>, vector<64x32xbf16>, vector<8x32xf32> -> vector<8x32xf32>
    %c0_59 = arith.constant 0 : index
    %c0_60 = arith.constant 0 : index
    %c0_61 = arith.constant 0 : index
    %124 = vector.load %arg15[%c0_59, %c0_60, %c0_61] : memref<1x1x32xf32, #tpu.memory_space<vmem>>, vector<1x1x32xf32>
    %125 = vector.shape_cast %124 : vector<1x1x32xf32> to vector<1x32xf32>
    %126 = vector.broadcast %125 : vector<1x32xf32> to vector<8x32xf32>
    %127 = arith.addf %123, %126 : vector<8x32xf32>
    %128 = arith.addf %83, %127 : vector<8x32xf32>
    %c0_62 = arith.constant 0 : index
    %c0_63 = arith.constant 0 : index
    %129 = vector.load %arg17[%c0_62, %c0_63] : memref<8x32xf32, #tpu.memory_space<vmem>>, vector<8x32xf32>
    tpu.vector_store %arg17[%c0_62, %c0_63], %128 {strides = array<i32>} : memref<8x32xf32, #tpu.memory_space<vmem>>, vector<8x32xf32>,
    %c1_i32 = arith.constant 1 : i32
    %130 = arith.cmpi eq, %arg1, %c1_i32 : i32
    %131 = arith.extui %130 : i1 to i32
    %c0_i32_64 = arith.constant 0 : i32
    %132 = arith.cmpi ne, %131, %c0_i32_64 : i32
    scf.if %132 {
      %c0_65 = arith.constant 0 : index
      %c0_66 = arith.constant 0 : index
      %c0_67 = arith.constant 0 : index
      %133 = vector.load %arg16[%c0_65, %c0_66, %c0_67] : memref<1x8x32xf32, #tpu.memory_space<vmem>>, vector<1x8x32xf32>
      %134 = vector.shape_cast %133 : vector<1x8x32xf32> to vector<8x32xf32>
      %135 = vector.shape_cast %128 : vector<8x32xf32> to vector<1x8x32xf32>
      tpu.vector_store %arg16[%c0_65, %c0_66, %c0_67], %135 {strides = array<i32>} : memref<1x8x32xf32, #tpu.memory_space<vmem>>, vector<1x8x32xf32>,
    } else {
    }
    return
  }
  func.func @transform_0(%arg0: i32, %arg1: i32) -> (i32, i32, i32) {
    %c0_i32 = arith.constant 0 : i32
    %c0_i32_0 = arith.constant 0 : i32
    %c0_i32_1 = arith.constant 0 : i32
    return %arg0, %c0_i32, %c0_i32_0 : i32, i32, i32
  }
  func.func @transform_1(%arg0: i32, %arg1: i32) -> (i32, i32, i32) {
    %c0_i32 = arith.constant 0 : i32
    %c0_i32_0 = arith.constant 0 : i32
    %c0_i32_1 = arith.constant 0 : i32
    return %arg0, %c0_i32, %c0_i32_0 : i32, i32, i32
  }
  func.func @transform_2(%arg0: i32, %arg1: i32) -> (i32, i32, i32) {
    %c0_i32 = arith.constant 0 : i32
    %c0_i32_0 = arith.constant 0 : i32
    %c0_i32_1 = arith.constant 0 : i32
    return %arg1, %c0_i32, %c0_i32_0 : i32, i32, i32
  }
  func.func @transform_3(%arg0: i32, %arg1: i32) -> (i32, i32, i32) {
    %c0_i32 = arith.constant 0 : i32
    %c0_i32_0 = arith.constant 0 : i32
    %c0_i32_1 = arith.constant 0 : i32
    return %arg1, %c0_i32, %c0_i32_0 : i32, i32, i32
  }
  func.func @transform_4(%arg0: i32, %arg1: i32) -> (i32, i32, i32) {
    %c0_i32 = arith.constant 0 : i32
    %c0_i32_0 = arith.constant 0 : i32
    %c0_i32_1 = arith.constant 0 : i32
    return %arg1, %c0_i32, %c0_i32_0 : i32, i32, i32
  }
  func.func @transform_5(%arg0: i32, %arg1: i32) -> (i32, i32, i32) {
    %c0_i32 = arith.constant 0 : i32
    %c0_i32_0 = arith.constant 0 : i32
    %c0_i32_1 = arith.constant 0 : i32
    return %arg1, %c0_i32, %c0_i32_0 : i32, i32, i32
  }
  func.func @transform_6(%arg0: i32, %arg1: i32) -> (i32, i32, i32) {
    %c0_i32 = arith.constant 0 : i32
    %c0_i32_0 = arith.constant 0 : i32
    %c0_i32_1 = arith.constant 0 : i32
    return %arg1, %c0_i32, %c0_i32_0 : i32, i32, i32
  }
  func.func @transform_7(%arg0: i32, %arg1: i32) -> (i32, i32, i32) {
    %c0_i32 = arith.constant 0 : i32
    %c0_i32_0 = arith.constant 0 : i32
    %c0_i32_1 = arith.constant 0 : i32
    return %arg1, %c0_i32, %c0_i32_0 : i32, i32, i32
  }
  func.func @transform_8(%arg0: i32, %arg1: i32) -> (i32, i32, i32) {
    %c0_i32 = arith.constant 0 : i32
    %c0_i32_0 = arith.constant 0 : i32
    %c0_i32_1 = arith.constant 0 : i32
    return %arg1, %c0_i32, %c0_i32_0 : i32, i32, i32
  }
  func.func @transform_9(%arg0: i32, %arg1: i32) -> (i32, i32, i32) {
    %c0_i32 = arith.constant 0 : i32
    %c0_i32_0 = arith.constant 0 : i32
    %c0_i32_1 = arith.constant 0 : i32
    return %arg1, %c0_i32, %c0_i32_0 : i32, i32, i32
  }
  func.func @transform_10(%arg0: i32, %arg1: i32) -> (i32, i32, i32) {
    %c0_i32 = arith.constant 0 : i32
    %c0_i32_0 = arith.constant 0 : i32
    %c0_i32_1 = arith.constant 0 : i32
    return %arg1, %c0_i32, %c0_i32_0 : i32, i32, i32
  }
  func.func @transform_11(%arg0: i32, %arg1: i32) -> (i32, i32, i32) {
    %c0_i32 = arith.constant 0 : i32
    %c0_i32_0 = arith.constant 0 : i32
    %c0_i32_1 = arith.constant 0 : i32
    return %arg1, %c0_i32, %c0_i32_0 : i32, i32, i32
  }
  func.func @transform_12(%arg0: i32, %arg1: i32) -> (i32, i32, i32) {
    %c0_i32 = arith.constant 0 : i32
    %c0_i32_0 = arith.constant 0 : i32
    %c0_i32_1 = arith.constant 0 : i32
    return %arg1, %c0_i32, %c0_i32_0 : i32, i32, i32
  }
  func.func @transform_13(%arg0: i32, %arg1: i32) -> (i32, i32, i32) {
    %c0_i32 = arith.constant 0 : i32
    %c0_i32_0 = arith.constant 0 : i32
    %c0_i32_1 = arith.constant 0 : i32
    return %arg1, %c0_i32, %c0_i32_0 : i32, i32, i32
  }
  func.func @transform_14(%arg0: i32, %arg1: i32) -> (i32, i32, i32) {
    %c0_i32 = arith.constant 0 : i32
    %c0_i32_0 = arith.constant 0 : i32
    %c0_i32_1 = arith.constant 0 : i32
    return %arg0, %c0_i32, %c0_i32_0 : i32, i32, i32
  }
}

</mosaic_0001>

<llo_original>
// kernel: tpu_custom_call.1
$region0: #{tpu_custom_call.1}
  #allocation0 [shape = 'u32[]', space=smem, size = 0x4, offset = 0x4, fixed_abs, tag = 'smem constant byte address 0x4 - core index']
  #allocation1 [shape = 'u32[144,128]{1,0:T(1,128)}', space=vmem, size = 0x12000, scoped, tag = 'internal scratch']
  #allocation2 [shape = 'f32[8,32]{1,0:T(8,128)}', space=vmem, size = 0x1000, scoped, tag = 'scratch operand']
  %s0 = inlined_call_operand.hbm [shape: f32[2,8,32], index: 0, kind: input, shape index: {}]
  %s1 = inlined_call_operand.hbm [shape: f32[2,1,8], index: 1, kind: input, shape index: {}]
  %s2 = inlined_call_operand.vmem [shape: f32[2,1,32], index: 2, kind: input, shape index: {}]
  %s3 = inlined_call_operand.vmem [shape: f32[2,1,32], index: 3, kind: input, shape index: {}]
  %s4 = inlined_call_operand.vmem [shape: bf16[2,32,96], index: 4, kind: input, shape index: {}]
  %s5 = inlined_call_operand.vmem [shape: f32[2,1,96], index: 5, kind: input, shape index: {}]
  %s6 = inlined_call_operand.vmem [shape: bf16[2,32,32], index: 6, kind: input, shape index: {}]
  %s7 = inlined_call_operand.vmem [shape: f32[2,1,32], index: 7, kind: input, shape index: {}]
  %s8 = inlined_call_operand.vmem [shape: f32[2,1,32], index: 8, kind: input, shape index: {}]
  %s9 = inlined_call_operand.vmem [shape: f32[2,1,32], index: 9, kind: input, shape index: {}]
  %s10 = inlined_call_operand.vmem [shape: bf16[2,32,64], index: 10, kind: input, shape index: {}]
  %s11 = inlined_call_operand.vmem [shape: f32[2,1,64], index: 11, kind: input, shape index: {}]
  %s12 = inlined_call_operand.vmem [shape: bf16[2,64,32], index: 12, kind: input, shape index: {}]
  %s13 = inlined_call_operand.vmem [shape: f32[2,1,32], index: 13, kind: input, shape index: {}]
  %s14 = inlined_call_operand.hbm [shape: f32[2,8,32], index: 14, kind: output, shape index: {}]
  %s15 = sld [smem:[#allocation0]]
  $region105: #{tpu_custom_call.1} parent=0
    _
  %s17 = ssub.s32 1, %s15
  %s18 = scalar_select 0, %s17, %s15
  $region1: #{tpu_custom_call.1} parent=0
    #allocation3 [shape = 'u8[8192]{0}', space=vmem, size = 0x2000, scoped, tag = 'input window, operand 0']
    #allocation4 [shape = 's32[2]{0}', space=sflag, size = 0x8, scoped, tag = 'scoped memory for tpu_custom_call.1']
    #allocation5 [shape = 's32[2]{0}', space=sflag, size = 0x8, scoped, tag = 'scoped memory for tpu_custom_call.1']
    #allocation6 [shape = 'u8[1024]{0}', space=vmem, size = 0x400, scoped, tag = 'input window, operand 1']
    #allocation7 [shape = 's32[2]{0}', space=sflag, size = 0x8, scoped, tag = 'scoped memory for tpu_custom_call.1']
    #allocation8 [shape = 'u8[8192]{0}', space=vmem, size = 0x2000, scoped, tag = 'output window, operand 0']
    %19 = vsyncpa [#allocation4], 0
    %s20 = scalar_lea.sflag [#allocation4], 1
    %21 = vsyncpa %s20, 0
    %22 = vsyncpa [#allocation7], 0
    %s23 = scalar_lea.sflag [#allocation7], 1
    %24 = vsyncpa %s23, 0
    %25 = vsyncpa [#allocation5], 0
    %s26 = scalar_lea.sflag [#allocation5], 1
    %27 = vsyncpa %s26, 0
    loop: start=0, step=1, limit=6
    $region2: #{tpu_custom_call.1} parent=1 // loop_pre_header
      _
    $region3: #{tpu_custom_call.1} parent=1 // loop_header
      %s29 = sphi 0, %s33
      %p30 = scmp.ge.s32.totalorder %s29, 6
      %s36 = sphi 0, %s48
      %s37 = sphi 0, %s44
      %s38 = sphi 0, %s36
      %s39 = sphi 0, %s37
      %s40 = sphi 0, %s38
      %s41 = sphi 0, %s39
      %s51 = sphi 0, %s53
      %s54 = sphi 0, %s51
      %s55 = sphi 0, %s54
      %s71 = sphi 0, %s55
      %s77 = sphi 0, %s79
      %s80 = sphi 0, %s77
      %s81 = sphi 0, %s80
      %s97 = sphi 0, %s81
      %s103 = sphi 0, %s105
      %s106 = sphi 0, %s103
      %s107 = sphi 0, %s106
      %s123 = sphi 0, %s107
      %s129 = sphi 0, %s131
      %s132 = sphi 0, %s129
      %s133 = sphi 0, %s132
      %s149 = sphi 0, %s133
      %s155 = sphi 0, %s157
      %s158 = sphi 0, %s155
      %s159 = sphi 0, %s158
      %s175 = sphi 0, %s159
      %s181 = sphi 0, %s183
      %s184 = sphi 0, %s181
      %s185 = sphi 0, %s184
      %s201 = sphi 0, %s185
      %s207 = sphi 0, %s209
      %s210 = sphi 0, %s207
      %s211 = sphi 0, %s210
      %s227 = sphi 0, %s211
      %s233 = sphi 0, %s235
      %s236 = sphi 0, %s233
      %s237 = sphi 0, %s236
      %s253 = sphi 0, %s237
      %s259 = sphi 0, %s261
      %s262 = sphi 0, %s259
      %s263 = sphi 0, %s262
      %s279 = sphi 0, %s263
      %s285 = sphi 0, %s287
      %s288 = sphi 0, %s285
      %s289 = sphi 0, %s288
      %s305 = sphi 0, %s289
      %s311 = sphi 0, %s313
      %s314 = sphi 0, %s311
      %s315 = sphi 0, %s314
      %s331 = sphi 0, %s315
      %s337 = sphi 0, %s339
      %s340 = sphi 0, %s337
      %s341 = sphi 0, %s340
      %s357 = sphi 0, %s341
      %s363 = sphi 0, %s365
      %s366 = sphi 0, %s363
      %s367 = sphi 0, %s366
      %s383 = sphi 0, %s367
      %s389 = sphi 0, %s391
      %s392 = sphi 0, %s389
      %s393 = sphi 0, %s392
      %s409 = sphi 0, %s393
      %s415 = sphi 0, %s417
      %s418 = sphi 0, %s415
      %s419 = sphi 0, %s418
      %s435 = sphi 0, %s419
    $region4: #{tpu_custom_call.1} parent=1 // loop_header_branch
      %32 = sbr.rel (%p30) target = $region8
    $region5: #{tpu_custom_call.1} parent=1 // loop_body
      %s34 = ssub.s32 %s29, 1
      %s35 = ssub.s32 %s29, 2
      %s42 = sadd.s32 1, %s37
      %p43 = scmp.ge.s32.totalorder %s42, 2
      %s44 = scalar_select %p43, 0, %s42
      %s45 = sadd.s32 1, %s36
      %s46 = scalar_select %p43, %s45, %s36
      %p47 = scmp.ge.s32.totalorder %s46, 2
      %s48 = scalar_select %p47, 0, %s46
      %s49 = ssub.s32 %s36, %s48
      %p50 = scmp.eq.s32.totalorder %s49, 0
      %s52 = sadd.s32 %s51, 1
      %s53 = scalar_select %p50, %s51, %s52
      %p56 = pneg %p50
      %p57 = scmp.eq.s32.totalorder %s29, 3
      %p58 = por %p56, %p57
      %p59 = scmp.ne.s32.totalorder %s51, %s54
      %p60 = scmp.eq.s32.totalorder %s29, 0
      %p61 = por %p59, %p60
      %p62 = scmp.ne.s32.totalorder %s51, %s54
      %p63 = scmp.eq.s32.totalorder %s34, 3
      %p64 = por %p62, %p63
      %p65 = scmp.ne.s32.totalorder %s54, %s55
      %p66 = scmp.eq.s32.totalorder %s34, 0
      %p67 = por %p65, %p66
      %p68 = scmp.ne.s32.totalorder %s54, %s55
      %p69 = scmp.eq.s32.totalorder %s35, 3
      %p70 = por %p68, %p69
      %p72 = scmp.ne.s32.totalorder %s55, %s71
      %p73 = scmp.eq.s32.totalorder %s35, 0
      %p74 = por %p72, %p73
      %s75 = ssub.s32 %s36, %s48
      %p76 = scmp.eq.s32.totalorder %s75, 0
      %s78 = sadd.s32 %s77, 1
      %s79 = scalar_select %p76, %s77, %s78
      %p82 = pneg %p76
      %p83 = scmp.eq.s32.totalorder %s29, 3
      %p84 = por %p82, %p83
      %p85 = scmp.ne.s32.totalorder %s77, %s80
      %p86 = scmp.eq.s32.totalorder %s29, 0
      %p87 = por %p85, %p86
      %p88 = scmp.ne.s32.totalorder %s77, %s80
      %p89 = scmp.eq.s32.totalorder %s34, 3
      %p90 = por %p88, %p89
      %p91 = scmp.ne.s32.totalorder %s80, %s81
      %p92 = scmp.eq.s32.totalorder %s34, 0
      %p93 = por %p91, %p92
      %p94 = scmp.ne.s32.totalorder %s80, %s81
      %p95 = scmp.eq.s32.totalorder %s35, 3
      %p96 = por %p94, %p95
      %p98 = scmp.ne.s32.totalorder %s81, %s97
      %p99 = scmp.eq.s32.totalorder %s35, 0
      %p100 = por %p98, %p99
      %s101 = ssub.s32 %s37, %s44
      %p102 = scmp.eq.s32.totalorder %s101, 0
      %s104 = sadd.s32 %s103, 1
      %s105 = scalar_select %p102, %s103, %s104
      %p108 = pneg %p102
      %p109 = scmp.eq.s32.totalorder %s29, 3
      %p110 = por %p108, %p109
      %p111 = scmp.ne.s32.totalorder %s103, %s106
      %p112 = scmp.eq.s32.totalorder %s29, 0
      %p113 = por %p111, %p112
      %p114 = scmp.ne.s32.totalorder %s103, %s106
      %p115 = scmp.eq.s32.totalorder %s34, 3
      %p116 = por %p114, %p115
      %p117 = scmp.ne.s32.totalorder %s106, %s107
      %p118 = scmp.eq.s32.totalorder %s34, 0
      %p119 = por %p117, %p118
      %p120 = scmp.ne.s32.totalorder %s106, %s107
      %p121 = scmp.eq.s32.totalorder %s35, 3
      %p122 = por %p120, %p121
      %p124 = scmp.ne.s32.totalorder %s107, %s123
      %p125 = scmp.eq.s32.totalorder %s35, 0
      %p126 = por %p124, %p125
      %s127 = ssub.s32 %s37, %s44
      %p128 = scmp.eq.s32.totalorder %s127, 0
      %s130 = sadd.s32 %s129, 1
      %s131 = scalar_select %p128, %s129, %s130
      %p134 = pneg %p128
      %p135 = scmp.eq.s32.totalorder %s29, 3
      %p136 = por %p134, %p135
      %p137 = scmp.ne.s32.totalorder %s129, %s132
      %p138 = scmp.eq.s32.totalorder %s29, 0
      %p139 = por %p137, %p138
      %p140 = scmp.ne.s32.totalorder %s129, %s132
      %p141 = scmp.eq.s32.totalorder %s34, 3
      %p142 = por %p140, %p141
      %p143 = scmp.ne.s32.totalorder %s132, %s133
      %p144 = scmp.eq.s32.totalorder %s34, 0
      %p145 = por %p143, %p144
      %p146 = scmp.ne.s32.totalorder %s132, %s133
      %p147 = scmp.eq.s32.totalorder %s35, 3
      %p148 = por %p146, %p147
      %p150 = scmp.ne.s32.totalorder %s133, %s149
      %p151 = scmp.eq.s32.totalorder %s35, 0
      %p152 = por %p150, %p151
      %s153 = ssub.s32 %s37, %s44
      %p154 = scmp.eq.s32.totalorder %s153, 0
      %s156 = sadd.s32 %s155, 1
      %s157 = scalar_select %p154, %s155, %s156
      %p160 = pneg %p154
      %p161 = scmp.eq.s32.totalorder %s29, 3
      %p162 = por %p160, %p161
      %p163 = scmp.ne.s32.totalorder %s155, %s158
      %p164 = scmp.eq.s32.totalorder %s29, 0
      %p165 = por %p163, %p164
      %p166 = scmp.ne.s32.totalorder %s155, %s158
      %p167 = scmp.eq.s32.totalorder %s34, 3
      %p168 = por %p166, %p167
      %p169 = scmp.ne.s32.totalorder %s158, %s159
      %p170 = scmp.eq.s32.totalorder %s34, 0
      %p171 = por %p169, %p170
      %p172 = scmp.ne.s32.totalorder %s158, %s159
      %p173 = scmp.eq.s32.totalorder %s35, 3
      %p174 = por %p172, %p173
      %p176 = scmp.ne.s32.totalorder %s159, %s175
      %p177 = scmp.eq.s32.totalorder %s35, 0
      %p178 = por %p176, %p177
      %s179 = ssub.s32 %s37, %s44
      %p180 = scmp.eq.s32.totalorder %s179, 0
      %s182 = sadd.s32 %s181, 1
      %s183 = scalar_select %p180, %s181, %s182
      %p186 = pneg %p180
      %p187 = scmp.eq.s32.totalorder %s29, 3
      %p188 = por %p186, %p187
      %p189 = scmp.ne.s32.totalorder %s181, %s184
      %p190 = scmp.eq.s32.totalorder %s29, 0
      %p191 = por %p189, %p190
      %p192 = scmp.ne.s32.totalorder %s181, %s184
      %p193 = scmp.eq.s32.totalorder %s34, 3
      %p194 = por %p192, %p193
      %p195 = scmp.ne.s32.totalorder %s184, %s185
      %p196 = scmp.eq.s32.totalorder %s34, 0
      %p197 = por %p195, %p196
      %p198 = scmp.ne.s32.totalorder %s184, %s185
      %p199 = scmp.eq.s32.totalorder %s35, 3
      %p200 = por %p198, %p199
      %p202 = scmp.ne.s32.totalorder %s185, %s201
      %p203 = scmp.eq.s32.totalorder %s35, 0
      %p204 = por %p202, %p203
      %s205 = ssub.s32 %s37, %s44
      %p206 = scmp.eq.s32.totalorder %s205, 0
      %s208 = sadd.s32 %s207, 1
      %s209 = scalar_select %p206, %s207, %s208
      %p212 = pneg %p206
      %p213 = scmp.eq.s32.totalorder %s29, 3
      %p214 = por %p212, %p213
      %p215 = scmp.ne.s32.totalorder %s207, %s210
      %p216 = scmp.eq.s32.totalorder %s29, 0
      %p217 = por %p215, %p216
      %p218 = scmp.ne.s32.totalorder %s207, %s210
      %p219 = scmp.eq.s32.totalorder %s34, 3
      %p220 = por %p218, %p219
      %p221 = scmp.ne.s32.totalorder %s210, %s211
      %p222 = scmp.eq.s32.totalorder %s34, 0
      %p223 = por %p221, %p222
      %p224 = scmp.ne.s32.totalorder %s210, %s211
      %p225 = scmp.eq.s32.totalorder %s35, 3
      %p226 = por %p224, %p225
      %p228 = scmp.ne.s32.totalorder %s211, %s227
      %p229 = scmp.eq.s32.totalorder %s35, 0
      %p230 = por %p228, %p229
      %s231 = ssub.s32 %s37, %s44
      %p232 = scmp.eq.s32.totalorder %s231, 0
      %s234 = sadd.s32 %s233, 1
      %s235 = scalar_select %p232, %s233, %s234
      %p238 = pneg %p232
      %p239 = scmp.eq.s32.totalorder %s29, 3
      %p240 = por %p238, %p239
      %p241 = scmp.ne.s32.totalorder %s233, %s236
      %p242 = scmp.eq.s32.totalorder %s29, 0
      %p243 = por %p241, %p242
      %p244 = scmp.ne.s32.totalorder %s233, %s236
      %p245 = scmp.eq.s32.totalorder %s34, 3
      %p246 = por %p244, %p245
      %p247 = scmp.ne.s32.totalorder %s236, %s237
      %p248 = scmp.eq.s32.totalorder %s34, 0
      %p249 = por %p247, %p248
      %p250 = scmp.ne.s32.totalorder %s236, %s237
      %p251 = scmp.eq.s32.totalorder %s35, 3
      %p252 = por %p250, %p251
      %p254 = scmp.ne.s32.totalorder %s237, %s253
      %p255 = scmp.eq.s32.totalorder %s35, 0
      %p256 = por %p254, %p255
      %s257 = ssub.s32 %s37, %s44
      %p258 = scmp.eq.s32.totalorder %s257, 0
      %s260 = sadd.s32 %s259, 1
      %s261 = scalar_select %p258, %s259, %s260
      %p264 = pneg %p258
      %p265 = scmp.eq.s32.totalorder %s29, 3
      %p266 = por %p264, %p265
      %p267 = scmp.ne.s32.totalorder %s259, %s262
      %p268 = scmp.eq.s32.totalorder %s29, 0
      %p269 = por %p267, %p268
      %p270 = scmp.ne.s32.totalorder %s259, %s262
      %p271 = scmp.eq.s32.totalorder %s34, 3
      %p272 = por %p270, %p271
      %p273 = scmp.ne.s32.totalorder %s262, %s263
      %p274 = scmp.eq.s32.totalorder %s34, 0
      %p275 = por %p273, %p274
      %p276 = scmp.ne.s32.totalorder %s262, %s263
      %p277 = scmp.eq.s32.totalorder %s35, 3
      %p278 = por %p276, %p277
      %p280 = scmp.ne.s32.totalorder %s263, %s279
      %p281 = scmp.eq.s32.totalorder %s35, 0
      %p282 = por %p280, %p281
      %s283 = ssub.s32 %s37, %s44
      %p284 = scmp.eq.s32.totalorder %s283, 0
      %s286 = sadd.s32 %s285, 1
      %s287 = scalar_select %p284, %s285, %s286
      %p290 = pneg %p284
      %p291 = scmp.eq.s32.totalorder %s29, 3
      %p292 = por %p290, %p291
      %p293 = scmp.ne.s32.totalorder %s285, %s288
      %p294 = scmp.eq.s32.totalorder %s29, 0
      %p295 = por %p293, %p294
      %p296 = scmp.ne.s32.totalorder %s285, %s288
      %p297 = scmp.eq.s32.totalorder %s34, 3
      %p298 = por %p296, %p297
      %p299 = scmp.ne.s32.totalorder %s288, %s289
      %p300 = scmp.eq.s32.totalorder %s34, 0
      %p301 = por %p299, %p300
      %p302 = scmp.ne.s32.totalorder %s288, %s289
      %p303 = scmp.eq.s32.totalorder %s35, 3
      %p304 = por %p302, %p303
      %p306 = scmp.ne.s32.totalorder %s289, %s305
      %p307 = scmp.eq.s32.totalorder %s35, 0
      %p308 = por %p306, %p307
      %s309 = ssub.s32 %s37, %s44
      %p310 = scmp.eq.s32.totalorder %s309, 0
      %s312 = sadd.s32 %s311, 1
      %s313 = scalar_select %p310, %s311, %s312
      %p316 = pneg %p310
      %p317 = scmp.eq.s32.totalorder %s29, 3
      %p318 = por %p316, %p317
      %p319 = scmp.ne.s32.totalorder %s311, %s314
      %p320 = scmp.eq.s32.totalorder %s29, 0
      %p321 = por %p319, %p320
      %p322 = scmp.ne.s32.totalorder %s311, %s314
      %p323 = scmp.eq.s32.totalorder %s34, 3
      %p324 = por %p322, %p323
      %p325 = scmp.ne.s32.totalorder %s314, %s315
      %p326 = scmp.eq.s32.totalorder %s34, 0
      %p327 = por %p325, %p326
      %p328 = scmp.ne.s32.totalorder %s314, %s315
      %p329 = scmp.eq.s32.totalorder %s35, 3
      %p330 = por %p328, %p329
      %p332 = scmp.ne.s32.totalorder %s315, %s331
      %p333 = scmp.eq.s32.totalorder %s35, 0
      %p334 = por %p332, %p333
      %s335 = ssub.s32 %s37, %s44
      %p336 = scmp.eq.s32.totalorder %s335, 0
      %s338 = sadd.s32 %s337, 1
      %s339 = scalar_select %p336, %s337, %s338
      %p342 = pneg %p336
      %p343 = scmp.eq.s32.totalorder %s29, 3
      %p344 = por %p342, %p343
      %p345 = scmp.ne.s32.totalorder %s337, %s340
      %p346 = scmp.eq.s32.totalorder %s29, 0
      %p347 = por %p345, %p346
      %p348 = scmp.ne.s32.totalorder %s337, %s340
      %p349 = scmp.eq.s32.totalorder %s34, 3
      %p350 = por %p348, %p349
      %p351 = scmp.ne.s32.totalorder %s340, %s341
      %p352 = scmp.eq.s32.totalorder %s34, 0
      %p353 = por %p351, %p352
      %p354 = scmp.ne.s32.totalorder %s340, %s341
      %p355 = scmp.eq.s32.totalorder %s35, 3
      %p356 = por %p354, %p355
      %p358 = scmp.ne.s32.totalorder %s341, %s357
      %p359 = scmp.eq.s32.totalorder %s35, 0
      %p360 = por %p358, %p359
      %s361 = ssub.s32 %s37, %s44
      %p362 = scmp.eq.s32.totalorder %s361, 0
      %s364 = sadd.s32 %s363, 1
      %s365 = scalar_select %p362, %s363, %s364
      %p368 = pneg %p362
      %p369 = scmp.eq.s32.totalorder %s29, 3
      %p370 = por %p368, %p369
      %p371 = scmp.ne.s32.totalorder %s363, %s366
      %p372 = scmp.eq.s32.totalorder %s29, 0
      %p373 = por %p371, %p372
      %p374 = scmp.ne.s32.totalorder %s363, %s366
      %p375 = scmp.eq.s32.totalorder %s34, 3
      %p376 = por %p374, %p375
      %p377 = scmp.ne.s32.totalorder %s366, %s367
      %p378 = scmp.eq.s32.totalorder %s34, 0
      %p379 = por %p377, %p378
      %p380 = scmp.ne.s32.totalorder %s366, %s367
      %p381 = scmp.eq.s32.totalorder %s35, 3
      %p382 = por %p380, %p381
      %p384 = scmp.ne.s32.totalorder %s367, %s383
      %p385 = scmp.eq.s32.totalorder %s35, 0
      %p386 = por %p384, %p385
      %s387 = ssub.s32 %s37, %s44
      %p388 = scmp.eq.s32.totalorder %s387, 0
      %s390 = sadd.s32 %s389, 1
      %s391 = scalar_select %p388, %s389, %s390
      %p394 = pneg %p388
      %p395 = scmp.eq.s32.totalorder %s29, 3
      %p396 = por %p394, %p395
      %p397 = scmp.ne.s32.totalorder %s389, %s392
      %p398 = scmp.eq.s32.totalorder %s29, 0
      %p399 = por %p397, %p398
      %p400 = scmp.ne.s32.totalorder %s389, %s392
      %p401 = scmp.eq.s32.totalorder %s34, 3
      %p402 = por %p400, %p401
      %p403 = scmp.ne.s32.totalorder %s392, %s393
      %p404 = scmp.eq.s32.totalorder %s34, 0
      %p405 = por %p403, %p404
      %p406 = scmp.ne.s32.totalorder %s392, %s393
      %p407 = scmp.eq.s32.totalorder %s35, 3
      %p408 = por %p406, %p407
      %p410 = scmp.ne.s32.totalorder %s393, %s409
      %p411 = scmp.eq.s32.totalorder %s35, 0
      %p412 = por %p410, %p411
      %s413 = ssub.s32 %s36, %s48
      %p414 = scmp.eq.s32.totalorder %s413, 0
      %s416 = sadd.s32 %s415, 1
      %s417 = scalar_select %p414, %s415, %s416
      %p420 = pneg %p414
      %p421 = scmp.eq.s32.totalorder %s29, 3
      %p422 = por %p420, %p421
      %p423 = scmp.ne.s32.totalorder %s415, %s418
      %p424 = scmp.eq.s32.totalorder %s29, 0
      %p425 = por %p423, %p424
      %p426 = scmp.ne.s32.totalorder %s415, %s418
      %p427 = scmp.eq.s32.totalorder %s34, 3
      %p428 = por %p426, %p427
      %p429 = scmp.ne.s32.totalorder %s418, %s419
      %p430 = scmp.eq.s32.totalorder %s34, 0
      %p431 = por %p429, %p430
      %p432 = scmp.ne.s32.totalorder %s418, %s419
      %p433 = scmp.eq.s32.totalorder %s35, 3
      %p434 = por %p432, %p433
      %p436 = scmp.ne.s32.totalorder %s419, %s435
      %p437 = scmp.eq.s32.totalorder %s35, 0
      %p438 = por %p436, %p437
      %p439 = scmp.le.s32.totalorder 1, %s29
      %p440 = scmp.lt.s32.totalorder %s29, 5
      %p441 = pnand %p439, %p440
      %p442 = pneg %p441
      // Predicated region
      $region9: #{tpu_custom_call.1} parent=5 // pred_check
        _
      $region10: #{tpu_custom_call.1} parent=5 // pred_check_branch
        %444 = sbr.rel (%p441) target = $region12
      $region11: #{tpu_custom_call.1} parent=5 // pred_region
        %s445 = ssub.s32 %s29, 1
      $region12: #{tpu_custom_call.1} parent=5 // pred_fallthru
        _
      %p446 = scmp.lt.s32.totalorder %s29, 4
      // Predicated region
      $region13: #{tpu_custom_call.1} parent=5 // pred_check
        %p447 = pneg %p446
      $region14: #{tpu_custom_call.1} parent=5 // pred_check_branch
        %449 = sbr.rel (%p447) target = $region16
      $region15: #{tpu_custom_call.1} parent=5 // pred_region
        // Predicated region
        $region17: #{tpu_custom_call.1} parent=15 // pred_check
          %p450 = pneg %p61
        $region18: #{tpu_custom_call.1} parent=15 // pred_check_branch
          %452 = sbr.rel (%p450) target = $region20
        $region19: #{tpu_custom_call.1} parent=15 // pred_region
          %s453 = sand.u32 %s51, 1
          %s454 = scalar_lea.sflag [#allocation4], %s453
          %s455 = sand.u32 %s51, 1
          %s456 = smul.addr %s455, 8
          %s457 = scalar_lea.vmem [#allocation3], %s456
          %s459 = ssub.s32 128, 128
          %460 = vsyncadd %s454, %s459
          %s461 = smul.addr %s36, 128
          %s462 = scalar_lea.hbm %s0, %s461
          %s464 = sshll.u32 %s457, 4
          %s465 = int_to_ptr.vmem [resolvable:$true] %s464
          %467 = dma.hbm_to_vmem [thread:$0]  %s462, 128, %s465, %s454
        $region20: #{tpu_custom_call.1} parent=15 // pred_fallthru
          _
        // Predicated region
        $region21: #{tpu_custom_call.1} parent=15 // pred_check
          %p468 = pneg %p87
        $region22: #{tpu_custom_call.1} parent=15 // pred_check_branch
          %470 = sbr.rel (%p468) target = $region24
        $region23: #{tpu_custom_call.1} parent=15 // pred_region
          %s471 = sand.u32 %s77, 1
          %s472 = scalar_lea.sflag [#allocation7], %s471
          %s473 = sand.u32 %s77, 1
          %s474 = scalar_lea.vmem [#allocation6], %s473
          %s476 = ssub.s32 16, 16
          %477 = vsyncadd %s472, %s476
          %s478 = smul.addr %s36, 16
          %s479 = scalar_lea.hbm %s1, %s478
          %s481 = sshll.u32 %s474, 4
          %s482 = int_to_ptr.vmem [resolvable:$true] %s481
          %484 = dma.hbm_to_vmem [thread:$0]  %s479, 16, %s482, %s472
        $region24: #{tpu_custom_call.1} parent=15 // pred_fallthru
          _
        // Predicated region
        $region25: #{tpu_custom_call.1} parent=15 // pred_check
          %p485 = pneg %p113
        $region26: #{tpu_custom_call.1} parent=15 // pred_check_branch
          %487 = sbr.rel (%p485) target = $region28
        $region27: #{tpu_custom_call.1} parent=15 // pred_region
          %p488 = scmp.lt.s32.totalorder %s37, 1
          %s489 = scalar_select %p488, %s37, 1
          %s490 = scalar_lea.vmem %s2, %s489
        $region28: #{tpu_custom_call.1} parent=15 // pred_fallthru
          _
        // Predicated region
        $region29: #{tpu_custom_call.1} parent=15 // pred_check
          %p491 = pneg %p139
        $region30: #{tpu_custom_call.1} parent=15 // pred_check_branch
          %493 = sbr.rel (%p491) target = $region32
        $region31: #{tpu_custom_call.1} parent=15 // pred_region
          %p494 = scmp.lt.s32.totalorder %s37, 1
          %s495 = scalar_select %p494, %s37, 1
          %s496 = scalar_lea.vmem %s3, %s495
        $region32: #{tpu_custom_call.1} parent=15 // pred_fallthru
          _
        // Predicated region
        $region33: #{tpu_custom_call.1} parent=15 // pred_check
          %p497 = pneg %p165
        $region34: #{tpu_custom_call.1} parent=15 // pred_check_branch
          %499 = sbr.rel (%p497) target = $region36
        $region35: #{tpu_custom_call.1} parent=15 // pred_region
          %p500 = scmp.lt.s32.totalorder %s37, 1
          %s501 = scalar_select %p500, %s37, 1
          %s502 = smul.addr %s501, 4
          %s503 = smul.addr %s502, 4
          %s504 = scalar_lea.vmem %s4, %s503
        $region36: #{tpu_custom_call.1} parent=15 // pred_fallthru
          _
        // Predicated region
        $region37: #{tpu_custom_call.1} parent=15 // pred_check
          %p505 = pneg %p191
        $region38: #{tpu_custom_call.1} parent=15 // pred_check_branch
          %507 = sbr.rel (%p505) target = $region40
        $region39: #{tpu_custom_call.1} parent=15 // pred_region
          %p508 = scmp.lt.s32.totalorder %s37, 1
          %s509 = scalar_select %p508, %s37, 1
          %s510 = scalar_lea.vmem %s5, %s509
        $region40: #{tpu_custom_call.1} parent=15 // pred_fallthru
          _
        // Predicated region
        $region41: #{tpu_custom_call.1} parent=15 // pred_check
          %p511 = pneg %p217
        $region42: #{tpu_custom_call.1} parent=15 // pred_check_branch
          %513 = sbr.rel (%p511) target = $region44
        $region43: #{tpu_custom_call.1} parent=15 // pred_region
          %p514 = scmp.lt.s32.totalorder %s37, 1
          %s515 = scalar_select %p514, %s37, 1
          %s516 = smul.addr %s515, 4
          %s517 = smul.addr %s516, 4
          %s518 = scalar_lea.vmem %s6, %s517
        $region44: #{tpu_custom_call.1} parent=15 // pred_fallthru
          _
        // Predicated region
        $region45: #{tpu_custom_call.1} parent=15 // pred_check
          %p519 = pneg %p243
        $region46: #{tpu_custom_call.1} parent=15 // pred_check_branch
          %521 = sbr.rel (%p519) target = $region48
        $region47: #{tpu_custom_call.1} parent=15 // pred_region
          %p522 = scmp.lt.s32.totalorder %s37, 1
          %s523 = scalar_select %p522, %s37, 1
          %s524 = scalar_lea.vmem %s7, %s523
        $region48: #{tpu_custom_call.1} parent=15 // pred_fallthru
          _
        // Predicated region
        $region49: #{tpu_custom_call.1} parent=15 // pred_check
          %p525 = pneg %p269
        $region50: #{tpu_custom_call.1} parent=15 // pred_check_branch
          %527 = sbr.rel (%p525) target = $region52
        $region51: #{tpu_custom_call.1} parent=15 // pred_region
          %p528 = scmp.lt.s32.totalorder %s37, 1
          %s529 = scalar_select %p528, %s37, 1
          %s530 = scalar_lea.vmem %s8, %s529
        $region52: #{tpu_custom_call.1} parent=15 // pred_fallthru
          _
        // Predicated region
        $region53: #{tpu_custom_call.1} parent=15 // pred_check
          %p531 = pneg %p295
        $region54: #{tpu_custom_call.1} parent=15 // pred_check_branch
          %533 = sbr.rel (%p531) target = $region56
        $region55: #{tpu_custom_call.1} parent=15 // pred_region
          %p534 = scmp.lt.s32.totalorder %s37, 1
          %s535 = scalar_select %p534, %s37, 1
          %s536 = scalar_lea.vmem %s9, %s535
        $region56: #{tpu_custom_call.1} parent=15 // pred_fallthru
          _
        // Predicated region
        $region57: #{tpu_custom_call.1} parent=15 // pred_check
          %p537 = pneg %p321
        $region58: #{tpu_custom_call.1} parent=15 // pred_check_branch
          %539 = sbr.rel (%p537) target = $region60
        $region59: #{tpu_custom_call.1} parent=15 // pred_region
          %p540 = scmp.lt.s32.totalorder %s37, 1
          %s541 = scalar_select %p540, %s37, 1
          %s542 = smul.addr %s541, 4
          %s543 = smul.addr %s542, 4
          %s544 = scalar_lea.vmem %s10, %s543
        $region60: #{tpu_custom_call.1} parent=15 // pred_fallthru
          _
        // Predicated region
        $region61: #{tpu_custom_call.1} parent=15 // pred_check
          %p545 = pneg %p347
        $region62: #{tpu_custom_call.1} parent=15 // pred_check_branch
          %547 = sbr.rel (%p545) target = $region64
        $region63: #{tpu_custom_call.1} parent=15 // pred_region
          %p548 = scmp.lt.s32.totalorder %s37, 1
          %s549 = scalar_select %p548, %s37, 1
          %s550 = scalar_lea.vmem %s11, %s549
        $region64: #{tpu_custom_call.1} parent=15 // pred_fallthru
          _
        // Predicated region
        $region65: #{tpu_custom_call.1} parent=15 // pred_check
          %p551 = pneg %p373
        $region66: #{tpu_custom_call.1} parent=15 // pred_check_branch
          %553 = sbr.rel (%p551) target = $region68
        $region67: #{tpu_custom_call.1} parent=15 // pred_region
          %p554 = scmp.lt.s32.totalorder %s37, 1
          %s555 = scalar_select %p554, %s37, 1
          %s556 = smul.addr %s555, 8
          %s557 = smul.addr %s556, 4
          %s558 = scalar_lea.vmem %s12, %s557
        $region68: #{tpu_custom_call.1} parent=15 // pred_fallthru
          _
        // Predicated region
        $region69: #{tpu_custom_call.1} parent=15 // pred_check
          %p559 = pneg %p399
        $region70: #{tpu_custom_call.1} parent=15 // pred_check_branch
          %561 = sbr.rel (%p559) target = $region72
        $region71: #{tpu_custom_call.1} parent=15 // pred_region
          %p562 = scmp.lt.s32.totalorder %s37, 1
          %s563 = scalar_select %p562, %s37, 1
          %s564 = scalar_lea.vmem %s13, %s563
        $region72: #{tpu_custom_call.1} parent=15 // pred_fallthru
          _
      $region16: #{tpu_custom_call.1} parent=5 // pred_fallthru
        _
      %p565 = scmp.le.s32.totalorder 1, %s29
      %p566 = scmp.lt.s32.totalorder %s29, 5
      %p567 = pnand %p565, %p566
      %p568 = pneg %p567
      // Predicated region
      $region73: #{tpu_custom_call.1} parent=5 // pred_check
        _
      $region74: #{tpu_custom_call.1} parent=5 // pred_check_branch
        %570 = sbr.rel (%p567) target = $region76
      $region75: #{tpu_custom_call.1} parent=5 // pred_region
        %s571 = ssub.s32 %s29, 1
        %s572 = sand.u32 %s54, 1
        %s573 = scalar_lea.sflag [#allocation4], %s572
        %s574 = sand.u32 %s54, 1
        %s575 = smul.addr %s574, 8
        %s576 = scalar_lea.vmem [#allocation3], %s575
        // Predicated region
        $region77: #{tpu_custom_call.1} parent=75 // pred_check
          %p577 = pneg %p67
        $region78: #{tpu_custom_call.1} parent=75 // pred_check_branch
          %579 = sbr.rel (%p577) target = $region80
        $region79: #{tpu_custom_call.1} parent=75 // pred_region
          %580 = dma.done %s573, 128
        $region80: #{tpu_custom_call.1} parent=75 // pred_fallthru
          _
        %s581 = sand.u32 %s80, 1
        %s582 = scalar_lea.sflag [#allocation7], %s581
        %s583 = sand.u32 %s80, 1
        %s584 = scalar_lea.vmem [#allocation6], %s583
        // Predicated region
        $region81: #{tpu_custom_call.1} parent=75 // pred_check
          %p585 = pneg %p93
        $region82: #{tpu_custom_call.1} parent=75 // pred_check_branch
          %587 = sbr.rel (%p585) target = $region84
        $region83: #{tpu_custom_call.1} parent=75 // pred_region
          %588 = dma.done %s582, 16
        $region84: #{tpu_custom_call.1} parent=75 // pred_fallthru
          _
        %s589 = sand.u32 %s54, 1
        %s590 = scalar_lea.sflag [#allocation4], %s589
        %s591 = sand.u32 %s54, 1
        %s592 = smul.addr %s591, 8
        %s593 = scalar_lea.vmem [#allocation3], %s592
        %p594 = pneg %p67
        %p595 = pneg %p64
        %s596 = sand.u32 %s80, 1
        %s597 = scalar_lea.sflag [#allocation7], %s596
        %s598 = sand.u32 %s80, 1
        %s599 = scalar_lea.vmem [#allocation6], %s598
        %p600 = pneg %p93
        %p601 = pneg %p90
        %p602 = scmp.lt.s32.totalorder %s39, 1
        %s603 = scalar_select %p602, %s39, 1
        %s604 = scalar_lea.vmem %s2, %s603
        %p605 = pneg %p119
        %p606 = pneg %p116
        %p607 = scmp.lt.s32.totalorder %s39, 1
        %s608 = scalar_select %p607, %s39, 1
        %s609 = scalar_lea.vmem %s3, %s608
        %p610 = pneg %p145
        %p611 = pneg %p142
        %p612 = scmp.lt.s32.totalorder %s39, 1
        %s613 = scalar_select %p612, %s39, 1
        %s614 = smul.addr %s613, 4
        %s615 = smul.addr %s614, 4
        %s616 = scalar_lea.vmem %s4, %s615
        %p617 = pneg %p171
        %p618 = pneg %p168
        %p619 = scmp.lt.s32.totalorder %s39, 1
        %s620 = scalar_select %p619, %s39, 1
        %s621 = scalar_lea.vmem %s5, %s620
        %p622 = pneg %p197
        %p623 = pneg %p194
        %p624 = scmp.lt.s32.totalorder %s39, 1
        %s625 = scalar_select %p624, %s39, 1
        %s626 = smul.addr %s625, 4
        %s627 = smul.addr %s626, 4
        %s628 = scalar_lea.vmem %s6, %s627
        %p629 = pneg %p223
        %p630 = pneg %p220
        %p631 = scmp.lt.s32.totalorder %s39, 1
        %s632 = scalar_select %p631, %s39, 1
        %s633 = scalar_lea.vmem %s7, %s632
        %p634 = pneg %p249
        %p635 = pneg %p246
        %p636 = scmp.lt.s32.totalorder %s39, 1
        %s637 = scalar_select %p636, %s39, 1
        %s638 = scalar_lea.vmem %s8, %s637
        %p639 = pneg %p275
        %p640 = pneg %p272
        %p641 = scmp.lt.s32.totalorder %s39, 1
        %s642 = scalar_select %p641, %s39, 1
        %s643 = scalar_lea.vmem %s9, %s642
        %p644 = pneg %p301
        %p645 = pneg %p298
        %p646 = scmp.lt.s32.totalorder %s39, 1
        %s647 = scalar_select %p646, %s39, 1
        %s648 = smul.addr %s647, 4
        %s649 = smul.addr %s648, 4
        %s650 = scalar_lea.vmem %s10, %s649
        %p651 = pneg %p327
        %p652 = pneg %p324
        %p653 = scmp.lt.s32.totalorder %s39, 1
        %s654 = scalar_select %p653, %s39, 1
        %s655 = scalar_lea.vmem %s11, %s654
        %p656 = pneg %p353
        %p657 = pneg %p350
        %p658 = scmp.lt.s32.totalorder %s39, 1
        %s659 = scalar_select %p658, %s39, 1
        %s660 = smul.addr %s659, 8
        %s661 = smul.addr %s660, 4
        %s662 = scalar_lea.vmem %s12, %s661
        %p663 = pneg %p379
        %p664 = pneg %p376
        %p665 = scmp.lt.s32.totalorder %s39, 1
        %s666 = scalar_select %p665, %s39, 1
        %s667 = scalar_lea.vmem %s13, %s666
        %p668 = pneg %p405
        %p669 = pneg %p402
        %p670 = pneg %p431
        %p671 = pneg %p428
        %s672 = sand.u32 %s418, 1
        %s673 = scalar_lea.sflag [#allocation5], %s672
        %s674 = sand.u32 %s418, 1
        %s675 = smul.addr %s674, 8
        %s676 = scalar_lea.vmem [#allocation8], %s675
        %p677 = scmp.lt.s32.totalorder %s39, 1
        %s678 = scalar_select %p677, %s39, 1
        %s679 = scalar_lea.vmem %s2, %s678
        %p680 = scmp.lt.s32.totalorder %s39, 1
        %s681 = scalar_select %p680, %s39, 1
        %s682 = scalar_lea.vmem %s3, %s681
        %p683 = scmp.lt.s32.totalorder %s39, 1
        %s684 = scalar_select %p683, %s39, 1
        %s685 = smul.addr %s684, 4
        %s686 = smul.addr %s685, 4
        %s687 = scalar_lea.vmem %s4, %s686
        %p688 = scmp.lt.s32.totalorder %s39, 1
        %s689 = scalar_select %p688, %s39, 1
        %s690 = scalar_lea.vmem %s5, %s689
        %p691 = scmp.lt.s32.totalorder %s39, 1
        %s692 = scalar_select %p691, %s39, 1
        %s693 = smul.addr %s692, 4
        %s694 = smul.addr %s693, 4
        %s695 = scalar_lea.vmem %s6, %s694
        %p696 = scmp.lt.s32.totalorder %s39, 1
        %s697 = scalar_select %p696, %s39, 1
        %s698 = scalar_lea.vmem %s7, %s697
        %p699 = scmp.lt.s32.totalorder %s39, 1
        %s700 = scalar_select %p699, %s39, 1
        %s701 = scalar_lea.vmem %s8, %s700
        %p702 = scmp.lt.s32.totalorder %s39, 1
        %s703 = scalar_select %p702, %s39, 1
        %s704 = scalar_lea.vmem %s9, %s703
        %p705 = scmp.lt.s32.totalorder %s39, 1
        %s706 = scalar_select %p705, %s39, 1
        %s707 = smul.addr %s706, 4
        %s708 = smul.addr %s707, 4
        %s709 = scalar_lea.vmem %s10, %s708
        %p710 = scmp.lt.s32.totalorder %s39, 1
        %s711 = scalar_select %p710, %s39, 1
        %s712 = scalar_lea.vmem %s11, %s711
        %p713 = scmp.lt.s32.totalorder %s39, 1
        %s714 = scalar_select %p713, %s39, 1
        %s715 = smul.addr %s714, 8
        %s716 = smul.addr %s715, 4
        %s717 = scalar_lea.vmem %s12, %s716
        %p718 = scmp.lt.s32.totalorder %s39, 1
        %s719 = scalar_select %p718, %s39, 1
        %s720 = scalar_lea.vmem %s13, %s719
        %p722 = scmp.eq.s32.totalorder %s39, 0
        // Predicated region
        $region85: #{tpu_custom_call.1} parent=75 // pred_check
          %p723 = pneg %p722
        $region86: #{tpu_custom_call.1} parent=75 // pred_check_branch
          %725 = sbr.rel (%p723) target = $region88
        $region87: #{tpu_custom_call.1} parent=75 // pred_region
          %v726 = vld [vmem:[%s576] sm:$0xff]
          %vm727 = vcmask 261120
          %728 = vst.msk [vmem:[#allocation2] sm:$0xff] %vm727, %v726
        $region88: #{tpu_custom_call.1} parent=75 // pred_fallthru
          _
        %v729 = vld [vmem:[#allocation2] sm:$0xff]
        %v730 = vld [vmem:[%s584] sm:$0x1]
        %vm731 = vcmp.gt.f32.partialorder %v730, 0.0
        %v732 = vsel %vm731, 0.0, -1e+30
        %v733 = vld [vmem:[%s679] sm:$0x1]
        %v734 = vld [vmem:[%s682] sm:$0x1]
        %vm735 = vcmask 261120
        %v736 = vsel %vm735, %v729, 0.0
        %737 = vadd.xlane.f32.xlu0 %v736
        %v738 = vpop.xlane.xlu0 %737
        %v739 = vrcp.pop 32.0
        %v740 = vmul.f32 %v738, %v739
        %v741 = vsub.f32 %v729, %v740
        %v742 = vmul.f32 %v741, %v741
        %v743 = vsel %vm735, %v742, 0.0
        %744 = vadd.xlane.f32.xlu0 %v743
        %v745 = vpop.xlane.xlu0 %744
        %v746 = vmul.f32 %v745, %v739
        %v747 = vadd.f32 %v746, 1e-05
        %v748 = vrsqrt.pop %v747
        %v749 = vmul.f32 %v741, %v748
        %v751 = vlaneseq
        %v752 = vshrl.u32 %v751, 7
        %v753 = vsub.s32 0, %v752
        %v754 = vrot.slane %v733, %v753
        %v756 = vmul.f32 %v749, %v754
        %v758 = vlaneseq
        %v759 = vshrl.u32 %v758, 7
        %v760 = vsub.s32 0, %v759
        %v761 = vrot.slane %v734, %v760
        %v763 = vadd.f32 %v756, %v761
        %v764 = vpack.c.bf16 %v763, %v763
        %v765 = vld [vmem:[%s687] sm:$0xf]
        %v766 = vld [vmem:[%s687 + $0x4] sm:$0xf]
        %v767 = vld [vmem:[%s687 + $0x8] sm:$0xf]
        %v768 = vld [vmem:[%s687 + $0xc] sm:$0xf]
        %v769 = vld [vmem:[%s690] sm:$0x1]
        %v771 = vlaneseq
        %v772 = vshrl.u32 %v771, 7
        %v773 = vsub.s32 0, %v772
        %v774 = vrot.slane %v769, %v773
        %v780 = vunpack.c.l.b16 %v765
        %v781 = vunpack.c.l.b16 %v766
        %v782 = vunpack.c.l.b16 %v767
        %v783 = vunpack.c.l.b16 %v768
        %v784 = vpack.c.b16 %v781, %v780
        %v785 = vpack.c.b16 %v783, %v782
        %v789 = vsel %vm735, %v764, 0
        %791 = vmatprep.subr.bf16.mxu0 0
        %792 = vmatpush1.bf16.msra.mxu0 0
        %793 = vmatprep.subr.bf16.mxu0 0
        %794 = vmatpush1.bf16.msra.mxu0 0
        %795 = vmatprep.subr.bf16.mxu0 0
        %796 = vmatpush1.bf16.msra.mxu0 0
        %797 = vmatprep.subr.bf16.mxu0 0
        %798 = vmatpush1.bf16.msra.mxu0 0
        %799 = vmatprep.subr.bf16.mxu0 0
        %800 = vmatpush1.bf16.msra.mxu0 0
        %801 = vmatprep.subr.bf16.mxu0 0
        %802 = vmatpush1.bf16.msra.mxu0 0
        %803 = vmatprep.subr.bf16.mxu0 0
        %804 = vmatpush1.bf16.msra.mxu0 %v785
        %805 = vmatprep.subr.bf16.mxu0 0
        %806 = vmatpush1.bf16.msra.mxu0 %v784
        %807 = vmatprep.subr.bf16.mxu0 0
        %808 = vmatpush2.bf16.msra.mxu0 0
        %809 = vmatprep.subr.bf16.mxu0 0
        %810 = vmatpush2.bf16.msra.mxu0 0
        %811 = vmatprep.subr.bf16.mxu0 0
        %812 = vmatpush2.bf16.msra.mxu0 0
        %813 = vmatprep.subr.bf16.mxu0 0
        %814 = vmatpush2.bf16.msra.mxu0 0
        %815 = vmatprep.subr.bf16.mxu0 0
        %816 = vmatpush2.bf16.msra.mxu0 0
        %817 = vmatprep.subr.bf16.mxu0 0
        %818 = vmatpush2.bf16.msra.mxu0 0
        %819 = vmatprep.subr.bf16.mxu0 0
        %820 = vmatpush2.bf16.msra.mxu0 0
        %821 = vmatprep.subr.bf16.mxu0 0
        %822 = vmatpush2.bf16.msra.mxu0 0
        %823 = vmatprep.mubr.bf16.mxu0 0
        %824 = vmatmul.mubr.bf16.gmra.mxu0 %v789
        %v825 = vpop.f32.mrf.mxu0
        %v826 = vadd.f32 %v774, %v825
        %v827 = vpop.f32.mrf.mxu0
        %v828 = vpop.f32.mrf.mxu0
        %v829 = vpop.f32.mrf.mxu0
        %830 = vdwg.mxu0
        %832 = vrot.lane.b32.xlu0 %v826, 120
        %v833 = vpop.permute.xlu0 %832
        %835 = vrot.lane.b32.xlu0 %v826, 112
        %v836 = vpop.permute.xlu0 %835
        %838 = vrot.lane.b32.xlu0 %v826, 104
        %v839 = vpop.permute.xlu0 %838
        %v841 = vcombine.low %v826, %v836
        %v842 = vcombine.high %v826, %v836
        %v844 = vunpack.c.l.s4 1983009808
        %v845 = vunpack.c.0.s8 %v844
        %v846 = vlaneseq
        %v847 = vshrl.u32 %v846, 7
        %v848 = vsub.s32 %v845, %v847
        %v849 = vrot.slane %v841, %v848
        %v851 = vunpack.c.l.s4 1983009808
        %v852 = vunpack.c.0.s8 %v851
        %v853 = vlaneseq
        %v854 = vshrl.u32 %v853, 7
        %v855 = vsub.s32 %v852, %v854
        %v856 = vrot.slane %v842, %v855
        %v857 = vcombine.low %v833, %v839
        %v858 = vcombine.high %v833, %v839
        %v860 = vunpack.c.l.s4 1983009808
        %v861 = vunpack.c.0.s8 %v860
        %v862 = vlaneseq
        %v863 = vshrl.u32 %v862, 7
        %v864 = vsub.s32 %v861, %v863
        %v865 = vrot.slane %v857, %v864
        %v867 = vunpack.c.l.s4 1983009808
        %v868 = vunpack.c.0.s8 %v867
        %v869 = vlaneseq
        %v870 = vshrl.u32 %v869, 7
        %v871 = vsub.s32 %v868, %v870
        %v872 = vrot.slane %v858, %v871
        %v873 = vcombine.low %v849, %v865
        %v874 = vcombine.high %v849, %v865
        %v876 = vunpack.c.l.s4 1934713408
        %v877 = vunpack.c.0.s8 %v876
        %v878 = vlaneseq
        %v879 = vshrl.u32 %v878, 7
        %v880 = vsub.s32 %v877, %v879
        %v881 = vrot.slane %v873, %v880
        %v883 = vunpack.c.l.s4 1934713408
        %v884 = vunpack.c.0.s8 %v883
        %v885 = vlaneseq
        %v886 = vshrl.u32 %v885, 7
        %v887 = vsub.s32 %v884, %v886
        %v888 = vrot.slane %v874, %v887
        %v889 = vcombine.low %v856, %v872
        %v890 = vcombine.high %v856, %v872
        %v892 = vunpack.c.l.s4 1934713408
        %v893 = vunpack.c.0.s8 %v892
        %v894 = vlaneseq
        %v895 = vshrl.u32 %v894, 7
        %v896 = vsub.s32 %v893, %v895
        %v897 = vrot.slane %v889, %v896
        %v899 = vunpack.c.l.s4 1934713408
        %v900 = vunpack.c.0.s8 %v899
        %v901 = vlaneseq
        %v902 = vshrl.u32 %v901, 7
        %v903 = vsub.s32 %v900, %v902
        %v904 = vrot.slane %v890, %v903
        %v905 = vcombine.high %v881, 0.0
        %v906 = vcombine.high %v888, 0.0
        %v907 = vcombine.high %v897, 0.0
        %v908 = vcombine.high %v904, 0.0
        %v909 = vcombine.low %v881, %v888
        %v911 = vunpack.c.l.s4 1983009808
        %v912 = vunpack.c.0.s8 %v911
        %v913 = vlaneseq
        %v914 = vshrl.u32 %v913, 7
        %v915 = vsub.s32 %v912, %v914
        %v916 = vrot.slane %v909, %v915
        %v917 = vcombine.low %v905, %v906
        %v919 = vunpack.c.l.s4 1983009808
        %v920 = vunpack.c.0.s8 %v919
        %v921 = vlaneseq
        %v922 = vshrl.u32 %v921, 7
        %v923 = vsub.s32 %v920, %v922
        %v924 = vrot.slane %v917, %v923
        %v925 = vcombine.low %v897, %v904
        %v927 = vunpack.c.l.s4 1983009808
        %v928 = vunpack.c.0.s8 %v927
        %v929 = vlaneseq
        %v930 = vshrl.u32 %v929, 7
        %v931 = vsub.s32 %v928, %v930
        %v932 = vrot.slane %v925, %v931
        %v933 = vcombine.low %v907, %v908
        %v935 = vunpack.c.l.s4 1983009808
        %v936 = vunpack.c.0.s8 %v935
        %v937 = vlaneseq
        %v938 = vshrl.u32 %v937, 7
        %v939 = vsub.s32 %v936, %v938
        %v940 = vrot.slane %v933, %v939
        %v941 = vcombine.low %v916, %v924
        %v942 = vcombine.high %v916, %v924
        %v944 = vunpack.c.l.s4 1934713408
        %v945 = vunpack.c.0.s8 %v944
        %v946 = vlaneseq
        %v947 = vshrl.u32 %v946, 7
        %v948 = vsub.s32 %v945, %v947
        %v949 = vrot.slane %v941, %v948
        %v951 = vunpack.c.l.s4 1934713408
        %v952 = vunpack.c.0.s8 %v951
        %v953 = vlaneseq
        %v954 = vshrl.u32 %v953, 7
        %v955 = vsub.s32 %v952, %v954
        %v956 = vrot.slane %v942, %v955
        %v957 = vcombine.low %v932, %v940
        %v958 = vcombine.high %v932, %v940
        %v960 = vunpack.c.l.s4 1934713408
        %v961 = vunpack.c.0.s8 %v960
        %v962 = vlaneseq
        %v963 = vshrl.u32 %v962, 7
        %v964 = vsub.s32 %v961, %v963
        %v965 = vrot.slane %v957, %v964
        %v967 = vunpack.c.l.s4 1934713408
        %v968 = vunpack.c.0.s8 %v967
        %v969 = vlaneseq
        %v970 = vshrl.u32 %v969, 7
        %v971 = vsub.s32 %v968, %v970
        %v972 = vrot.slane %v958, %v971
        %v973 = vcombine.low %v949, %v965
        %v974 = vcombine.high %v949, %v965
        %v975 = vcombine.low %v956, %v972
        %v976 = vcombine.high %v956, %v972
        %v977 = vpack.c.bf16 %v973, %v973
        %v978 = vpack.c.bf16 %v974, %v974
        %v979 = vpack.c.bf16 %v975, %v975
        %v980 = vpack.c.bf16 %v976, %v976
        %981 = vrot.lane.b32.xlu0 %v826, 96
        %v982 = vpop.permute.xlu0 %981
        %983 = vrot.lane.b32.xlu0 %v833, 96
        %v984 = vpop.permute.xlu0 %983
        %985 = vrot.lane.b32.xlu0 %v836, 96
        %v986 = vpop.permute.xlu0 %985
        %987 = vrot.lane.b32.xlu0 %v839, 96
        %v988 = vpop.permute.xlu0 %987
        %v993 = vcombine.low %v982, %v986
        %v994 = vcombine.high %v982, %v986
        %v996 = vunpack.c.l.s4 1983009808
        %v997 = vunpack.c.0.s8 %v996
        %v998 = vlaneseq
        %v999 = vshrl.u32 %v998, 7
        %v1000 = vsub.s32 %v997, %v999
        %v1001 = vrot.slane %v993, %v1000
        %v1003 = vunpack.c.l.s4 1983009808
        %v1004 = vunpack.c.0.s8 %v1003
        %v1005 = vlaneseq
        %v1006 = vshrl.u32 %v1005, 7
        %v1007 = vsub.s32 %v1004, %v1006
        %v1008 = vrot.slane %v994, %v1007
        %v1009 = vcombine.low %v984, %v988
        %v1010 = vcombine.high %v984, %v988
        %v1012 = vunpack.c.l.s4 1983009808
        %v1013 = vunpack.c.0.s8 %v1012
        %v1014 = vlaneseq
        %v1015 = vshrl.u32 %v1014, 7
        %v1016 = vsub.s32 %v1013, %v1015
        %v1017 = vrot.slane %v1009, %v1016
        %v1019 = vunpack.c.l.s4 1983009808
        %v1020 = vunpack.c.0.s8 %v1019
        %v1021 = vlaneseq
        %v1022 = vshrl.u32 %v1021, 7
        %v1023 = vsub.s32 %v1020, %v1022
        %v1024 = vrot.slane %v1010, %v1023
        %v1025 = vcombine.low %v1001, %v1017
        %v1026 = vcombine.high %v1001, %v1017
        %v1028 = vunpack.c.l.s4 1934713408
        %v1029 = vunpack.c.0.s8 %v1028
        %v1030 = vlaneseq
        %v1031 = vshrl.u32 %v1030, 7
        %v1032 = vsub.s32 %v1029, %v1031
        %v1033 = vrot.slane %v1025, %v1032
        %v1035 = vunpack.c.l.s4 1934713408
        %v1036 = vunpack.c.0.s8 %v1035
        %v1037 = vlaneseq
        %v1038 = vshrl.u32 %v1037, 7
        %v1039 = vsub.s32 %v1036, %v1038
        %v1040 = vrot.slane %v1026, %v1039
        %v1041 = vcombine.low %v1008, %v1024
        %v1042 = vcombine.high %v1008, %v1024
        %v1044 = vunpack.c.l.s4 1934713408
        %v1045 = vunpack.c.0.s8 %v1044
        %v1046 = vlaneseq
        %v1047 = vshrl.u32 %v1046, 7
        %v1048 = vsub.s32 %v1045, %v1047
        %v1049 = vrot.slane %v1041, %v1048
        %v1051 = vunpack.c.l.s4 1934713408
        %v1052 = vunpack.c.0.s8 %v1051
        %v1053 = vlaneseq
        %v1054 = vshrl.u32 %v1053, 7
        %v1055 = vsub.s32 %v1052, %v1054
        %v1056 = vrot.slane %v1042, %v1055
        %v1057 = vcombine.high %v1033, 0.0
        %v1058 = vcombine.high %v1040, 0.0
        %v1059 = vcombine.high %v1049, 0.0
        %v1060 = vcombine.high %v1056, 0.0
        %v1061 = vcombine.low %v1033, %v1040
        %v1063 = vunpack.c.l.s4 1983009808
        %v1064 = vunpack.c.0.s8 %v1063
        %v1065 = vlaneseq
        %v1066 = vshrl.u32 %v1065, 7
        %v1067 = vsub.s32 %v1064, %v1066
        %v1068 = vrot.slane %v1061, %v1067
        %v1069 = vcombine.low %v1057, %v1058
        %v1071 = vunpack.c.l.s4 1983009808
        %v1072 = vunpack.c.0.s8 %v1071
        %v1073 = vlaneseq
        %v1074 = vshrl.u32 %v1073, 7
        %v1075 = vsub.s32 %v1072, %v1074
        %v1076 = vrot.slane %v1069, %v1075
        %v1077 = vcombine.low %v1049, %v1056
        %v1079 = vunpack.c.l.s4 1983009808
        %v1080 = vunpack.c.0.s8 %v1079
        %v1081 = vlaneseq
        %v1082 = vshrl.u32 %v1081, 7
        %v1083 = vsub.s32 %v1080, %v1082
        %v1084 = vrot.slane %v1077, %v1083
        %v1085 = vcombine.low %v1059, %v1060
        %v1087 = vunpack.c.l.s4 1983009808
        %v1088 = vunpack.c.0.s8 %v1087
        %v1089 = vlaneseq
        %v1090 = vshrl.u32 %v1089, 7
        %v1091 = vsub.s32 %v1088, %v1090
        %v1092 = vrot.slane %v1085, %v1091
        %v1093 = vcombine.low %v1068, %v1076
        %v1094 = vcombine.high %v1068, %v1076
        %v1096 = vunpack.c.l.s4 1934713408
        %v1097 = vunpack.c.0.s8 %v1096
        %v1098 = vlaneseq
        %v1099 = vshrl.u32 %v1098, 7
        %v1100 = vsub.s32 %v1097, %v1099
        %v1101 = vrot.slane %v1093, %v1100
        %v1103 = vunpack.c.l.s4 1934713408
        %v1104 = vunpack.c.0.s8 %v1103
        %v1105 = vlaneseq
        %v1106 = vshrl.u32 %v1105, 7
        %v1107 = vsub.s32 %v1104, %v1106
        %v1108 = vrot.slane %v1094, %v1107
        %v1109 = vcombine.low %v1084, %v1092
        %v1110 = vcombine.high %v1084, %v1092
        %v1112 = vunpack.c.l.s4 1934713408
        %v1113 = vunpack.c.0.s8 %v1112
        %v1114 = vlaneseq
        %v1115 = vshrl.u32 %v1114, 7
        %v1116 = vsub.s32 %v1113, %v1115
        %v1117 = vrot.slane %v1109, %v1116
        %v1119 = vunpack.c.l.s4 1934713408
        %v1120 = vunpack.c.0.s8 %v1119
        %v1121 = vlaneseq
        %v1122 = vshrl.u32 %v1121, 7
        %v1123 = vsub.s32 %v1120, %v1122
        %v1124 = vrot.slane %v1110, %v1123
        %v1125 = vcombine.low %v1101, %v1117
        %v1126 = vcombine.high %v1101, %v1117
        %v1127 = vcombine.low %v1108, %v1124
        %v1128 = vcombine.high %v1108, %v1124
        %v1129 = vpack.c.bf16 %v1125, %v1125
        %v1130 = vpack.c.bf16 %v1126, %v1126
        %v1131 = vpack.c.bf16 %v1127, %v1127
        %v1132 = vpack.c.bf16 %v1128, %v1128
        %1133 = vrot.lane.b32.xlu0 %v826, 64
        %v1134 = vpop.permute.xlu0 %1133
        %1135 = vrot.lane.b32.xlu0 %v833, 64
        %v1136 = vpop.permute.xlu0 %1135
        %1137 = vrot.lane.b32.xlu0 %v836, 64
        %v1138 = vpop.permute.xlu0 %1137
        %1139 = vrot.lane.b32.xlu0 %v839, 64
        %v1140 = vpop.permute.xlu0 %1139
        %v1145 = vcombine.low %v1134, %v1138
        %v1146 = vcombine.high %v1134, %v1138
        %v1148 = vunpack.c.l.s4 1983009808
        %v1149 = vunpack.c.0.s8 %v1148
        %v1150 = vlaneseq
        %v1151 = vshrl.u32 %v1150, 7
        %v1152 = vsub.s32 %v1149, %v1151
        %v1153 = vrot.slane %v1145, %v1152
        %v1155 = vunpack.c.l.s4 1983009808
        %v1156 = vunpack.c.0.s8 %v1155
        %v1157 = vlaneseq
        %v1158 = vshrl.u32 %v1157, 7
        %v1159 = vsub.s32 %v1156, %v1158
        %v1160 = vrot.slane %v1146, %v1159
        %v1161 = vcombine.low %v1136, %v1140
        %v1162 = vcombine.high %v1136, %v1140
        %v1164 = vunpack.c.l.s4 1983009808
        %v1165 = vunpack.c.0.s8 %v1164
        %v1166 = vlaneseq
        %v1167 = vshrl.u32 %v1166, 7
        %v1168 = vsub.s32 %v1165, %v1167
        %v1169 = vrot.slane %v1161, %v1168
        %v1171 = vunpack.c.l.s4 1983009808
        %v1172 = vunpack.c.0.s8 %v1171
        %v1173 = vlaneseq
        %v1174 = vshrl.u32 %v1173, 7
        %v1175 = vsub.s32 %v1172, %v1174
        %v1176 = vrot.slane %v1162, %v1175
        %v1177 = vcombine.low %v1153, %v1169
        %v1178 = vcombine.high %v1153, %v1169
        %v1180 = vunpack.c.l.s4 1934713408
        %v1181 = vunpack.c.0.s8 %v1180
        %v1182 = vlaneseq
        %v1183 = vshrl.u32 %v1182, 7
        %v1184 = vsub.s32 %v1181, %v1183
        %v1185 = vrot.slane %v1177, %v1184
        %v1187 = vunpack.c.l.s4 1934713408
        %v1188 = vunpack.c.0.s8 %v1187
        %v1189 = vlaneseq
        %v1190 = vshrl.u32 %v1189, 7
        %v1191 = vsub.s32 %v1188, %v1190
        %v1192 = vrot.slane %v1178, %v1191
        %v1193 = vcombine.low %v1160, %v1176
        %v1194 = vcombine.high %v1160, %v1176
        %v1196 = vunpack.c.l.s4 1934713408
        %v1197 = vunpack.c.0.s8 %v1196
        %v1198 = vlaneseq
        %v1199 = vshrl.u32 %v1198, 7
        %v1200 = vsub.s32 %v1197, %v1199
        %v1201 = vrot.slane %v1193, %v1200
        %v1203 = vunpack.c.l.s4 1934713408
        %v1204 = vunpack.c.0.s8 %v1203
        %v1205 = vlaneseq
        %v1206 = vshrl.u32 %v1205, 7
        %v1207 = vsub.s32 %v1204, %v1206
        %v1208 = vrot.slane %v1194, %v1207
        %v1209 = vcombine.high %v1185, 0.0
        %v1210 = vcombine.high %v1192, 0.0
        %v1211 = vcombine.high %v1201, 0.0
        %v1212 = vcombine.high %v1208, 0.0
        %v1213 = vcombine.low %v1185, %v1192
        %v1215 = vunpack.c.l.s4 1983009808
        %v1216 = vunpack.c.0.s8 %v1215
        %v1217 = vlaneseq
        %v1218 = vshrl.u32 %v1217, 7
        %v1219 = vsub.s32 %v1216, %v1218
        %v1220 = vrot.slane %v1213, %v1219
        %v1221 = vcombine.low %v1209, %v1210
        %v1223 = vunpack.c.l.s4 1983009808
        %v1224 = vunpack.c.0.s8 %v1223
        %v1225 = vlaneseq
        %v1226 = vshrl.u32 %v1225, 7
        %v1227 = vsub.s32 %v1224, %v1226
        %v1228 = vrot.slane %v1221, %v1227
        %v1229 = vcombine.low %v1201, %v1208
        %v1231 = vunpack.c.l.s4 1983009808
        %v1232 = vunpack.c.0.s8 %v1231
        %v1233 = vlaneseq
        %v1234 = vshrl.u32 %v1233, 7
        %v1235 = vsub.s32 %v1232, %v1234
        %v1236 = vrot.slane %v1229, %v1235
        %v1237 = vcombine.low %v1211, %v1212
        %v1239 = vunpack.c.l.s4 1983009808
        %v1240 = vunpack.c.0.s8 %v1239
        %v1241 = vlaneseq
        %v1242 = vshrl.u32 %v1241, 7
        %v1243 = vsub.s32 %v1240, %v1242
        %v1244 = vrot.slane %v1237, %v1243
        %v1245 = vcombine.low %v1220, %v1228
        %v1246 = vcombine.high %v1220, %v1228
        %v1248 = vunpack.c.l.s4 1934713408
        %v1249 = vunpack.c.0.s8 %v1248
        %v1250 = vlaneseq
        %v1251 = vshrl.u32 %v1250, 7
        %v1252 = vsub.s32 %v1249, %v1251
        %v1253 = vrot.slane %v1245, %v1252
        %v1255 = vunpack.c.l.s4 1934713408
        %v1256 = vunpack.c.0.s8 %v1255
        %v1257 = vlaneseq
        %v1258 = vshrl.u32 %v1257, 7
        %v1259 = vsub.s32 %v1256, %v1258
        %v1260 = vrot.slane %v1246, %v1259
        %v1261 = vcombine.low %v1236, %v1244
        %v1262 = vcombine.high %v1236, %v1244
        %v1264 = vunpack.c.l.s4 1934713408
        %v1265 = vunpack.c.0.s8 %v1264
        %v1266 = vlaneseq
        %v1267 = vshrl.u32 %v1266, 7
        %v1268 = vsub.s32 %v1265, %v1267
        %v1269 = vrot.slane %v1261, %v1268
        %v1271 = vunpack.c.l.s4 1934713408
        %v1272 = vunpack.c.0.s8 %v1271
        %v1273 = vlaneseq
        %v1274 = vshrl.u32 %v1273, 7
        %v1275 = vsub.s32 %v1272, %v1274
        %v1276 = vrot.slane %v1262, %v1275
        %v1277 = vcombine.low %v1253, %v1269
        %v1278 = vcombine.high %v1253, %v1269
        %v1279 = vcombine.low %v1260, %v1276
        %v1280 = vcombine.high %v1260, %v1276
        %v1281 = vpack.c.bf16 %v1277, %v1277
        %v1282 = vpack.c.bf16 %v1278, %v1278
        %v1283 = vpack.c.bf16 %v1279, %v1279
        %v1284 = vpack.c.bf16 %v1280, %v1280
        %v1286 = vlaneseq
        %v1287 = vshrl.u32 %v1286, 7
        %v1288 = vsub.s32 0, %v1287
        %v1289 = vrot.slane %v732, %v1288
        %vm1291 = vcmask 64512
        %v1293 = vsel %vm1291, %v977, 0
        %v1296 = vsel %vm1291, %v1129, 0
        %1298 = vmatprep.subr.bf16.mxu0 0
        %1299 = vmatpush1.bf16.xpose.msra.mxu0 0
        %1300 = vmatprep.subr.bf16.mxu0 0
        %1301 = vmatpush1.bf16.xpose.msra.mxu0 0
        %1302 = vmatprep.subr.bf16.mxu0 0
        %1303 = vmatpush1.bf16.xpose.msra.mxu0 0
        %1304 = vmatprep.subr.bf16.mxu0 0
        %1305 = vmatpush1.bf16.xpose.msra.mxu0 0
        %1306 = vmatprep.subr.bf16.mxu0 0
        %1307 = vmatpush1.bf16.xpose.msra.mxu0 0
        %1308 = vmatprep.subr.bf16.mxu0 0
        %1309 = vmatpush1.bf16.xpose.msra.mxu0 0
        %1310 = vmatprep.subr.bf16.mxu0 0
        %1311 = vmatpush1.bf16.xpose.msra.mxu0 0
        %1312 = vmatprep.subr.bf16.mxu0 0
        %1313 = vmatpush1.bf16.xpose.msra.mxu0 %v1296
        %1314 = vmatprep.subr.bf16.mxu0 0
        %1315 = vmatpush2.bf16.xpose.msra.mxu0 0
        %1316 = vmatprep.subr.bf16.mxu0 0
        %1317 = vmatpush2.bf16.xpose.msra.mxu0 0
        %1318 = vmatprep.subr.bf16.mxu0 0
        %1319 = vmatpush2.bf16.xpose.msra.mxu0 0
        %1320 = vmatprep.subr.bf16.mxu0 0
        %1321 = vmatpush2.bf16.xpose.msra.mxu0 0
        %1322 = vmatprep.subr.bf16.mxu0 0
        %1323 = vmatpush2.bf16.xpose.msra.mxu0 0
        %1324 = vmatprep.subr.bf16.mxu0 0
        %1325 = vmatpush2.bf16.xpose.msra.mxu0 0
        %1326 = vmatprep.subr.bf16.mxu0 0
        %1327 = vmatpush2.bf16.xpose.msra.mxu0 0
        %1328 = vmatprep.subr.bf16.mxu0 0
        %1329 = vmatpush2.bf16.xpose.msra.mxu0 0
        %1330 = vmatprep.mubr.bf16.mxu0 0
        %1331 = vmatmul.mubr.bf16.gmra.mxu0 %v1293
        %v1332 = vpop.f32.mrf.mxu0
        %v1333 = vadd.f32 %v1289, %v1332
        %v1334 = vpop.f32.mrf.mxu0
        %v1335 = vpop.f32.mrf.mxu0
        %v1336 = vpop.f32.mrf.mxu0
        %1337 = vdwg.mxu0
        %v1339 = vsel %vm1291, %v978, 0
        %v1342 = vsel %vm1291, %v1130, 0
        %1344 = vmatprep.subr.bf16.mxu0 0
        %1345 = vmatpush1.bf16.xpose.msra.mxu0 0
        %1346 = vmatprep.subr.bf16.mxu0 0
        %1347 = vmatpush1.bf16.xpose.msra.mxu0 0
        %1348 = vmatprep.subr.bf16.mxu0 0
        %1349 = vmatpush1.bf16.xpose.msra.mxu0 0
        %1350 = vmatprep.subr.bf16.mxu0 0
        %1351 = vmatpush1.bf16.xpose.msra.mxu0 0
        %1352 = vmatprep.subr.bf16.mxu0 0
        %1353 = vmatpush1.bf16.xpose.msra.mxu0 0
        %1354 = vmatprep.subr.bf16.mxu0 0
        %1355 = vmatpush1.bf16.xpose.msra.mxu0 0
        %1356 = vmatprep.subr.bf16.mxu0 0
        %1357 = vmatpush1.bf16.xpose.msra.mxu0 0
        %1358 = vmatprep.subr.bf16.mxu0 0
        %1359 = vmatpush1.bf16.xpose.msra.mxu0 %v1342
        %1360 = vmatprep.subr.bf16.mxu0 0
        %1361 = vmatpush2.bf16.xpose.msra.mxu0 0
        %1362 = vmatprep.subr.bf16.mxu0 0
        %1363 = vmatpush2.bf16.xpose.msra.mxu0 0
        %1364 = vmatprep.subr.bf16.mxu0 0
        %1365 = vmatpush2.bf16.xpose.msra.mxu0 0
        %1366 = vmatprep.subr.bf16.mxu0 0
        %1367 = vmatpush2.bf16.xpose.msra.mxu0 0
        %1368 = vmatprep.subr.bf16.mxu0 0
        %1369 = vmatpush2.bf16.xpose.msra.mxu0 0
        %1370 = vmatprep.subr.bf16.mxu0 0
        %1371 = vmatpush2.bf16.xpose.msra.mxu0 0
        %1372 = vmatprep.subr.bf16.mxu0 0
        %1373 = vmatpush2.bf16.xpose.msra.mxu0 0
        %1374 = vmatprep.subr.bf16.mxu0 0
        %1375 = vmatpush2.bf16.xpose.msra.mxu0 0
        %1376 = vmatprep.mubr.bf16.mxu0 0
        %1377 = vmatmul.mubr.bf16.gmra.mxu0 %v1339
        %v1378 = vpop.f32.mrf.mxu0
        %v1379 = vadd.f32 %v1289, %v1378
        %v1380 = vpop.f32.mrf.mxu0
        %v1381 = vpop.f32.mrf.mxu0
        %v1382 = vpop.f32.mrf.mxu0
        %1383 = vdwg.mxu0
        %v1385 = vsel %vm1291, %v979, 0
        %v1388 = vsel %vm1291, %v1131, 0
        %1390 = vmatprep.subr.bf16.mxu0 0
        %1391 = vmatpush1.bf16.xpose.msra.mxu0 0
        %1392 = vmatprep.subr.bf16.mxu0 0
        %1393 = vmatpush1.bf16.xpose.msra.mxu0 0
        %1394 = vmatprep.subr.bf16.mxu0 0
        %1395 = vmatpush1.bf16.xpose.msra.mxu0 0
        %1396 = vmatprep.subr.bf16.mxu0 0
        %1397 = vmatpush1.bf16.xpose.msra.mxu0 0
        %1398 = vmatprep.subr.bf16.mxu0 0
        %1399 = vmatpush1.bf16.xpose.msra.mxu0 0
        %1400 = vmatprep.subr.bf16.mxu0 0
        %1401 = vmatpush1.bf16.xpose.msra.mxu0 0
        %1402 = vmatprep.subr.bf16.mxu0 0
        %1403 = vmatpush1.bf16.xpose.msra.mxu0 0
        %1404 = vmatprep.subr.bf16.mxu0 0
        %1405 = vmatpush1.bf16.xpose.msra.mxu0 %v1388
        %1406 = vmatprep.subr.bf16.mxu0 0
        %1407 = vmatpush2.bf16.xpose.msra.mxu0 0
        %1408 = vmatprep.subr.bf16.mxu0 0
        %1409 = vmatpush2.bf16.xpose.msra.mxu0 0
        %1410 = vmatprep.subr.bf16.mxu0 0
        %1411 = vmatpush2.bf16.xpose.msra.mxu0 0
        %1412 = vmatprep.subr.bf16.mxu0 0
        %1413 = vmatpush2.bf16.xpose.msra.mxu0 0
        %1414 = vmatprep.subr.bf16.mxu0 0
        %1415 = vmatpush2.bf16.xpose.msra.mxu0 0
        %1416 = vmatprep.subr.bf16.mxu0 0
        %1417 = vmatpush2.bf16.xpose.msra.mxu0 0
        %1418 = vmatprep.subr.bf16.mxu0 0
        %1419 = vmatpush2.bf16.xpose.msra.mxu0 0
        %1420 = vmatprep.subr.bf16.mxu0 0
        %1421 = vmatpush2.bf16.xpose.msra.mxu0 0
        %1422 = vmatprep.mubr.bf16.mxu0 0
        %1423 = vmatmul.mubr.bf16.gmra.mxu0 %v1385
        %v1424 = vpop.f32.mrf.mxu0
        %v1425 = vadd.f32 %v1289, %v1424
        %v1426 = vpop.f32.mrf.mxu0
        %v1427 = vpop.f32.mrf.mxu0
        %v1428 = vpop.f32.mrf.mxu0
        %1429 = vdwg.mxu0
        %v1431 = vsel %vm1291, %v980, 0
        %v1434 = vsel %vm1291, %v1132, 0
        %1436 = vmatprep.subr.bf16.mxu0 0
        %1437 = vmatpush1.bf16.xpose.msra.mxu0 0
        %1438 = vmatprep.subr.bf16.mxu0 0
        %1439 = vmatpush1.bf16.xpose.msra.mxu0 0
        %1440 = vmatprep.subr.bf16.mxu0 0
        %1441 = vmatpush1.bf16.xpose.msra.mxu0 0
        %1442 = vmatprep.subr.bf16.mxu0 0
        %1443 = vmatpush1.bf16.xpose.msra.mxu0 0
        %1444 = vmatprep.subr.bf16.mxu0 0
        %1445 = vmatpush1.bf16.xpose.msra.mxu0 0
        %1446 = vmatprep.subr.bf16.mxu0 0
        %1447 = vmatpush1.bf16.xpose.msra.mxu0 0
        %1448 = vmatprep.subr.bf16.mxu0 0
        %1449 = vmatpush1.bf16.xpose.msra.mxu0 0
        %1450 = vmatprep.subr.bf16.mxu0 0
        %1451 = vmatpush1.bf16.xpose.msra.mxu0 %v1434
        %1452 = vmatprep.subr.bf16.mxu0 0
        %1453 = vmatpush2.bf16.xpose.msra.mxu0 0
        %1454 = vmatprep.subr.bf16.mxu0 0
        %1455 = vmatpush2.bf16.xpose.msra.mxu0 0
        %1456 = vmatprep.subr.bf16.mxu0 0
        %1457 = vmatpush2.bf16.xpose.msra.mxu0 0
        %1458 = vmatprep.subr.bf16.mxu0 0
        %1459 = vmatpush2.bf16.xpose.msra.mxu0 0
        %1460 = vmatprep.subr.bf16.mxu0 0
        %1461 = vmatpush2.bf16.xpose.msra.mxu0 0
        %1462 = vmatprep.subr.bf16.mxu0 0
        %1463 = vmatpush2.bf16.xpose.msra.mxu0 0
        %1464 = vmatprep.subr.bf16.mxu0 0
        %1465 = vmatpush2.bf16.xpose.msra.mxu0 0
        %1466 = vmatprep.subr.bf16.mxu0 0
        %1467 = vmatpush2.bf16.xpose.msra.mxu0 0
        %1468 = vmatprep.mubr.bf16.mxu0 0
        %1469 = vmatmul.mubr.bf16.gmra.mxu0 %v1431
        %v1470 = vpop.f32.mrf.mxu0
        %v1471 = vadd.f32 %v1289, %v1470
        %v1472 = vpop.f32.mrf.mxu0
        %v1473 = vpop.f32.mrf.mxu0
        %v1474 = vpop.f32.mrf.mxu0
        %1475 = vdwg.mxu0
        %v1476 = vsel %vm1291, %v1333, -inf
        %1477 = vmax.xlane.f32.xlu0 %v1476
        %v1478 = vpop.xlane.xlu0 %1477
        %v1479 = vsel %vm1291, %v1379, -inf
        %1480 = vmax.xlane.f32.xlu0 %v1479
        %v1481 = vpop.xlane.xlu0 %1480
        %v1482 = vsel %vm1291, %v1425, -inf
        %1483 = vmax.xlane.f32.xlu0 %v1482
        %v1484 = vpop.xlane.xlu0 %1483
        %v1485 = vsel %vm1291, %v1471, -inf
        %1486 = vmax.xlane.f32.xlu0 %v1485
        %v1487 = vpop.xlane.xlu0 %1486
        %v1488 = vsub.f32 %v1333, %v1478
        %v1489 = vsub.f32 %v1379, %v1481
        %v1490 = vsub.f32 %v1425, %v1484
        %v1491 = vsub.f32 %v1471, %v1487
        %v1492 = vmul.f32 %v1488, 1.442695
        %v1493 = vpow.pop %v1492
        %v1494 = vmul.f32 %v1489, 1.442695
        %v1495 = vpow.pop %v1494
        %v1496 = vmul.f32 %v1490, 1.442695
        %v1497 = vpow.pop %v1496
        %v1498 = vmul.f32 %v1491, 1.442695
        %v1499 = vpow.pop %v1498
        %v1500 = vsel %vm1291, %v1493, 0.0
        %1501 = vadd.xlane.f32.xlu0 %v1500
        %v1502 = vpop.xlane.xlu0 %1501
        %v1503 = vsel %vm1291, %v1495, 0.0
        %1504 = vadd.xlane.f32.xlu0 %v1503
        %v1505 = vpop.xlane.xlu0 %1504
        %v1506 = vsel %vm1291, %v1497, 0.0
        %1507 = vadd.xlane.f32.xlu0 %v1506
        %v1508 = vpop.xlane.xlu0 %1507
        %v1509 = vsel %vm1291, %v1499, 0.0
        %1510 = vadd.xlane.f32.xlu0 %v1509
        %v1511 = vpop.xlane.xlu0 %1510
        %v1512 = vrcp.pop %v1502
        %v1513 = vrcp.pop %v1505
        %v1514 = vrcp.pop %v1508
        %v1515 = vrcp.pop %v1511
        %v1516 = vmul.f32 %v1493, %v1512
        %v1517 = vmul.f32 %v1495, %v1513
        %v1518 = vmul.f32 %v1497, %v1514
        %v1519 = vmul.f32 %v1499, %v1515
        %v1520 = vpack.c.bf16 %v1516, %v1516
        %v1521 = vpack.c.bf16 %v1517, %v1517
        %v1522 = vpack.c.bf16 %v1518, %v1518
        %v1523 = vpack.c.bf16 %v1519, %v1519
        %v1525 = vsel %vm1291, %v1520, 0
        %vm1527 = vcmask 1043456
        %v1529 = vsel %vm1527, %v1281, 0
        %1531 = vmatprep.subr.bf16.mxu0 0
        %1532 = vmatpush1.bf16.msra.mxu0 0
        %1533 = vmatprep.subr.bf16.mxu0 0
        %1534 = vmatpush1.bf16.msra.mxu0 0
        %1535 = vmatprep.subr.bf16.mxu0 0
        %1536 = vmatpush1.bf16.msra.mxu0 0
        %1537 = vmatprep.subr.bf16.mxu0 0
        %1538 = vmatpush1.bf16.msra.mxu0 0
        %1539 = vmatprep.subr.bf16.mxu0 0
        %1540 = vmatpush1.bf16.msra.mxu0 0
        %1541 = vmatprep.subr.bf16.mxu0 0
        %1542 = vmatpush1.bf16.msra.mxu0 0
        %1543 = vmatprep.subr.bf16.mxu0 0
        %1544 = vmatpush1.bf16.msra.mxu0 0
        %1545 = vmatprep.subr.bf16.mxu0 0
        %1546 = vmatpush1.bf16.msra.mxu0 %v1529
        %1547 = vmatprep.subr.bf16.mxu0 0
        %1548 = vmatpush2.bf16.msra.mxu0 0
        %1549 = vmatprep.subr.bf16.mxu0 0
        %1550 = vmatpush2.bf16.msra.mxu0 0
        %1551 = vmatprep.subr.bf16.mxu0 0
        %1552 = vmatpush2.bf16.msra.mxu0 0
        %1553 = vmatprep.subr.bf16.mxu0 0
        %1554 = vmatpush2.bf16.msra.mxu0 0
        %1555 = vmatprep.subr.bf16.mxu0 0
        %1556 = vmatpush2.bf16.msra.mxu0 0
        %1557 = vmatprep.subr.bf16.mxu0 0
        %1558 = vmatpush2.bf16.msra.mxu0 0
        %1559 = vmatprep.subr.bf16.mxu0 0
        %1560 = vmatpush2.bf16.msra.mxu0 0
        %1561 = vmatprep.subr.bf16.mxu0 0
        %1562 = vmatpush2.bf16.msra.mxu0 0
        %1563 = vmatprep.mubr.bf16.mxu0 0
        %1564 = vmatmul.mubr.bf16.gmra.mxu0 %v1525
        %v1565 = vpop.f32.mrf.mxu0
        %v1566 = vadd.f32 0.0, %v1565
        %v1567 = vpop.f32.mrf.mxu0
        %v1568 = vpop.f32.mrf.mxu0
        %v1569 = vpop.f32.mrf.mxu0
        %1570 = vdwg.mxu0
        %v1572 = vsel %vm1291, %v1521, 0
        %v1575 = vsel %vm1527, %v1282, 0
        %1577 = vmatprep.subr.bf16.mxu0 0
        %1578 = vmatpush1.bf16.msra.mxu0 0
        %1579 = vmatprep.subr.bf16.mxu0 0
        %1580 = vmatpush1.bf16.msra.mxu0 0
        %1581 = vmatprep.subr.bf16.mxu0 0
        %1582 = vmatpush1.bf16.msra.mxu0 0
        %1583 = vmatprep.subr.bf16.mxu0 0
        %1584 = vmatpush1.bf16.msra.mxu0 0
        %1585 = vmatprep.subr.bf16.mxu0 0
        %1586 = vmatpush1.bf16.msra.mxu0 0
        %1587 = vmatprep.subr.bf16.mxu0 0
        %1588 = vmatpush1.bf16.msra.mxu0 0
        %1589 = vmatprep.subr.bf16.mxu0 0
        %1590 = vmatpush1.bf16.msra.mxu0 0
        %1591 = vmatprep.subr.bf16.mxu0 0
        %1592 = vmatpush1.bf16.msra.mxu0 %v1575
        %1593 = vmatprep.subr.bf16.mxu0 0
        %1594 = vmatpush2.bf16.msra.mxu0 0
        %1595 = vmatprep.subr.bf16.mxu0 0
        %1596 = vmatpush2.bf16.msra.mxu0 0
        %1597 = vmatprep.subr.bf16.mxu0 0
        %1598 = vmatpush2.bf16.msra.mxu0 0
        %1599 = vmatprep.subr.bf16.mxu0 0
        %1600 = vmatpush2.bf16.msra.mxu0 0
        %1601 = vmatprep.subr.bf16.mxu0 0
        %1602 = vmatpush2.bf16.msra.mxu0 0
        %1603 = vmatprep.subr.bf16.mxu0 0
        %1604 = vmatpush2.bf16.msra.mxu0 0
        %1605 = vmatprep.subr.bf16.mxu0 0
        %1606 = vmatpush2.bf16.msra.mxu0 0
        %1607 = vmatprep.subr.bf16.mxu0 0
        %1608 = vmatpush2.bf16.msra.mxu0 0
        %1609 = vmatprep.mubr.bf16.mxu0 0
        %1610 = vmatmul.mubr.bf16.gmra.mxu0 %v1572
        %v1611 = vpop.f32.mrf.mxu0
        %v1612 = vadd.f32 0.0, %v1611
        %v1613 = vpop.f32.mrf.mxu0
        %v1614 = vpop.f32.mrf.mxu0
        %v1615 = vpop.f32.mrf.mxu0
        %1616 = vdwg.mxu0
        %v1618 = vsel %vm1291, %v1522, 0
        %v1621 = vsel %vm1527, %v1283, 0
        %1623 = vmatprep.subr.bf16.mxu0 0
        %1624 = vmatpush1.bf16.msra.mxu0 0
        %1625 = vmatprep.subr.bf16.mxu0 0
        %1626 = vmatpush1.bf16.msra.mxu0 0
        %1627 = vmatprep.subr.bf16.mxu0 0
        %1628 = vmatpush1.bf16.msra.mxu0 0
        %1629 = vmatprep.subr.bf16.mxu0 0
        %1630 = vmatpush1.bf16.msra.mxu0 0
        %1631 = vmatprep.subr.bf16.mxu0 0
        %1632 = vmatpush1.bf16.msra.mxu0 0
        %1633 = vmatprep.subr.bf16.mxu0 0
        %1634 = vmatpush1.bf16.msra.mxu0 0
        %1635 = vmatprep.subr.bf16.mxu0 0
        %1636 = vmatpush1.bf16.msra.mxu0 0
        %1637 = vmatprep.subr.bf16.mxu0 0
        %1638 = vmatpush1.bf16.msra.mxu0 %v1621
        %1639 = vmatprep.subr.bf16.mxu0 0
        %1640 = vmatpush2.bf16.msra.mxu0 0
        %1641 = vmatprep.subr.bf16.mxu0 0
        %1642 = vmatpush2.bf16.msra.mxu0 0
        %1643 = vmatprep.subr.bf16.mxu0 0
        %1644 = vmatpush2.bf16.msra.mxu0 0
        %1645 = vmatprep.subr.bf16.mxu0 0
        %1646 = vmatpush2.bf16.msra.mxu0 0
        %1647 = vmatprep.subr.bf16.mxu0 0
        %1648 = vmatpush2.bf16.msra.mxu0 0
        %1649 = vmatprep.subr.bf16.mxu0 0
        %1650 = vmatpush2.bf16.msra.mxu0 0
        %1651 = vmatprep.subr.bf16.mxu0 0
        %1652 = vmatpush2.bf16.msra.mxu0 0
        %1653 = vmatprep.subr.bf16.mxu0 0
        %1654 = vmatpush2.bf16.msra.mxu0 0
        %1655 = vmatprep.mubr.bf16.mxu0 0
        %1656 = vmatmul.mubr.bf16.gmra.mxu0 %v1618
        %v1657 = vpop.f32.mrf.mxu0
        %v1658 = vadd.f32 0.0, %v1657
        %v1659 = vpop.f32.mrf.mxu0
        %v1660 = vpop.f32.mrf.mxu0
        %v1661 = vpop.f32.mrf.mxu0
        %1662 = vdwg.mxu0
        %v1664 = vsel %vm1291, %v1523, 0
        %v1667 = vsel %vm1527, %v1284, 0
        %1669 = vmatprep.subr.bf16.mxu0 0
        %1670 = vmatpush1.bf16.msra.mxu0 0
        %1671 = vmatprep.subr.bf16.mxu0 0
        %1672 = vmatpush1.bf16.msra.mxu0 0
        %1673 = vmatprep.subr.bf16.mxu0 0
        %1674 = vmatpush1.bf16.msra.mxu0 0
        %1675 = vmatprep.subr.bf16.mxu0 0
        %1676 = vmatpush1.bf16.msra.mxu0 0
        %1677 = vmatprep.subr.bf16.mxu0 0
        %1678 = vmatpush1.bf16.msra.mxu0 0
        %1679 = vmatprep.subr.bf16.mxu0 0
        %1680 = vmatpush1.bf16.msra.mxu0 0
        %1681 = vmatprep.subr.bf16.mxu0 0
        %1682 = vmatpush1.bf16.msra.mxu0 0
        %1683 = vmatprep.subr.bf16.mxu0 0
        %1684 = vmatpush1.bf16.msra.mxu0 %v1667
        %1685 = vmatprep.subr.bf16.mxu0 0
        %1686 = vmatpush2.bf16.msra.mxu0 0
        %1687 = vmatprep.subr.bf16.mxu0 0
        %1688 = vmatpush2.bf16.msra.mxu0 0
        %1689 = vmatprep.subr.bf16.mxu0 0
        %1690 = vmatpush2.bf16.msra.mxu0 0
        %1691 = vmatprep.subr.bf16.mxu0 0
        %1692 = vmatpush2.bf16.msra.mxu0 0
        %1693 = vmatprep.subr.bf16.mxu0 0
        %1694 = vmatpush2.bf16.msra.mxu0 0
        %1695 = vmatprep.subr.bf16.mxu0 0
        %1696 = vmatpush2.bf16.msra.mxu0 0
        %1697 = vmatprep.subr.bf16.mxu0 0
        %1698 = vmatpush2.bf16.msra.mxu0 0
        %1699 = vmatprep.subr.bf16.mxu0 0
        %1700 = vmatpush2.bf16.msra.mxu0 0
        %1701 = vmatprep.mubr.bf16.mxu0 0
        %1702 = vmatmul.mubr.bf16.gmra.mxu0 %v1664
        %v1703 = vpop.f32.mrf.mxu0
        %v1704 = vadd.f32 0.0, %v1703
        %v1705 = vpop.f32.mrf.mxu0
        %v1706 = vpop.f32.mrf.mxu0
        %v1707 = vpop.f32.mrf.mxu0
        %1708 = vdwg.mxu0
        %v1709 = vcombine.low %v1566, %v1658
        %v1710 = vcombine.high %v1566, %v1658
        %v1712 = vunpack.c.l.s4 1983009808
        %v1713 = vunpack.c.0.s8 %v1712
        %v1714 = vlaneseq
        %v1715 = vshrl.u32 %v1714, 7
        %v1716 = vsub.s32 %v1713, %v1715
        %v1717 = vrot.slane %v1709, %v1716
        %v1719 = vunpack.c.l.s4 1983009808
        %v1720 = vunpack.c.0.s8 %v1719
        %v1721 = vlaneseq
        %v1722 = vshrl.u32 %v1721, 7
        %v1723 = vsub.s32 %v1720, %v1722
        %v1724 = vrot.slane %v1710, %v1723
        %v1725 = vcombine.low %v1612, %v1704
        %v1726 = vcombine.high %v1612, %v1704
        %v1728 = vunpack.c.l.s4 1983009808
        %v1729 = vunpack.c.0.s8 %v1728
        %v1730 = vlaneseq
        %v1731 = vshrl.u32 %v1730, 7
        %v1732 = vsub.s32 %v1729, %v1731
        %v1733 = vrot.slane %v1725, %v1732
        %v1735 = vunpack.c.l.s4 1983009808
        %v1736 = vunpack.c.0.s8 %v1735
        %v1737 = vlaneseq
        %v1738 = vshrl.u32 %v1737, 7
        %v1739 = vsub.s32 %v1736, %v1738
        %v1740 = vrot.slane %v1726, %v1739
        %v1741 = vcombine.low %v1717, %v1733
        %v1742 = vcombine.high %v1717, %v1733
        %v1744 = vunpack.c.l.s4 1934713408
        %v1745 = vunpack.c.0.s8 %v1744
        %v1746 = vlaneseq
        %v1747 = vshrl.u32 %v1746, 7
        %v1748 = vsub.s32 %v1745, %v1747
        %v1749 = vrot.slane %v1741, %v1748
        %v1751 = vunpack.c.l.s4 1934713408
        %v1752 = vunpack.c.0.s8 %v1751
        %v1753 = vlaneseq
        %v1754 = vshrl.u32 %v1753, 7
        %v1755 = vsub.s32 %v1752, %v1754
        %v1756 = vrot.slane %v1742, %v1755
        %v1757 = vcombine.low %v1724, %v1740
        %v1758 = vcombine.high %v1724, %v1740
        %v1760 = vunpack.c.l.s4 1934713408
        %v1761 = vunpack.c.0.s8 %v1760
        %v1762 = vlaneseq
        %v1763 = vshrl.u32 %v1762, 7
        %v1764 = vsub.s32 %v1761, %v1763
        %v1765 = vrot.slane %v1757, %v1764
        %v1767 = vunpack.c.l.s4 1934713408
        %v1768 = vunpack.c.0.s8 %v1767
        %v1769 = vlaneseq
        %v1770 = vshrl.u32 %v1769, 7
        %v1771 = vsub.s32 %v1768, %v1770
        %v1772 = vrot.slane %v1758, %v1771
        %v1773 = vcombine.high %v1749, 0.0
        %v1774 = vcombine.high %v1756, 0.0
        %v1775 = vcombine.high %v1765, 0.0
        %v1776 = vcombine.high %v1772, 0.0
        %v1777 = vcombine.low %v1749, %v1756
        %v1779 = vunpack.c.l.s4 1983009808
        %v1780 = vunpack.c.0.s8 %v1779
        %v1781 = vlaneseq
        %v1782 = vshrl.u32 %v1781, 7
        %v1783 = vsub.s32 %v1780, %v1782
        %v1784 = vrot.slane %v1777, %v1783
        %v1785 = vcombine.low %v1773, %v1774
        %v1787 = vunpack.c.l.s4 1983009808
        %v1788 = vunpack.c.0.s8 %v1787
        %v1789 = vlaneseq
        %v1790 = vshrl.u32 %v1789, 7
        %v1791 = vsub.s32 %v1788, %v1790
        %v1792 = vrot.slane %v1785, %v1791
        %v1793 = vcombine.low %v1765, %v1772
        %v1795 = vunpack.c.l.s4 1983009808
        %v1796 = vunpack.c.0.s8 %v1795
        %v1797 = vlaneseq
        %v1798 = vshrl.u32 %v1797, 7
        %v1799 = vsub.s32 %v1796, %v1798
        %v1800 = vrot.slane %v1793, %v1799
        %v1801 = vcombine.low %v1775, %v1776
        %v1803 = vunpack.c.l.s4 1983009808
        %v1804 = vunpack.c.0.s8 %v1803
        %v1805 = vlaneseq
        %v1806 = vshrl.u32 %v1805, 7
        %v1807 = vsub.s32 %v1804, %v1806
        %v1808 = vrot.slane %v1801, %v1807
        %v1809 = vcombine.low %v1784, %v1792
        %v1810 = vcombine.high %v1784, %v1792
        %v1812 = vunpack.c.l.s4 1934713408
        %v1813 = vunpack.c.0.s8 %v1812
        %v1814 = vlaneseq
        %v1815 = vshrl.u32 %v1814, 7
        %v1816 = vsub.s32 %v1813, %v1815
        %v1817 = vrot.slane %v1809, %v1816
        %v1819 = vunpack.c.l.s4 1934713408
        %v1820 = vunpack.c.0.s8 %v1819
        %v1821 = vlaneseq
        %v1822 = vshrl.u32 %v1821, 7
        %v1823 = vsub.s32 %v1820, %v1822
        %v1824 = vrot.slane %v1810, %v1823
        %v1825 = vcombine.low %v1800, %v1808
        %v1826 = vcombine.high %v1800, %v1808
        %v1828 = vunpack.c.l.s4 1934713408
        %v1829 = vunpack.c.0.s8 %v1828
        %v1830 = vlaneseq
        %v1831 = vshrl.u32 %v1830, 7
        %v1832 = vsub.s32 %v1829, %v1831
        %v1833 = vrot.slane %v1825, %v1832
        %v1835 = vunpack.c.l.s4 1934713408
        %v1836 = vunpack.c.0.s8 %v1835
        %v1837 = vlaneseq
        %v1838 = vshrl.u32 %v1837, 7
        %v1839 = vsub.s32 %v1836, %v1838
        %v1840 = vrot.slane %v1826, %v1839
        %v1841 = vcombine.low %v1817, %v1833
        %v1842 = vcombine.high %v1817, %v1833
        %v1843 = vcombine.low %v1824, %v1840
        %v1844 = vcombine.high %v1824, %v1840
        %1846 = vrot.lane.b32.xlu0 %v1842, 8
        %v1847 = vpop.permute.xlu0 %1846
        %1850 = vrot.lane.b32.xlu0 %v1843, 16
        %v1851 = vpop.permute.xlu0 %1850
        %1854 = vrot.lane.b32.xlu0 %v1844, 24
        %v1855 = vpop.permute.xlu0 %1854
        %v1857 = vsel %vm1291, %v1841, %v1847
        %vm1858 = vcmask 130048
        %v1859 = vsel %vm1858, %v1857, %v1851
        %vm1860 = vcmask 195584
        %v1861 = vsel %vm1860, %v1859, %v1855
        %v1862 = vpack.c.bf16 %v1861, %v1861
        %v1863 = vld [vmem:[%s695] sm:$0xf]
        %v1864 = vld [vmem:[%s695 + $0x4] sm:$0xf]
        %v1865 = vld [vmem:[%s695 + $0x8] sm:$0xf]
        %v1866 = vld [vmem:[%s695 + $0xc] sm:$0xf]
        %v1867 = vld [vmem:[%s698] sm:$0x1]
        %v1869 = vlaneseq
        %v1870 = vshrl.u32 %v1869, 7
        %v1871 = vsub.s32 0, %v1870
        %v1872 = vrot.slane %v1867, %v1871
        %v1878 = vunpack.c.l.b16 %v1863
        %v1879 = vunpack.c.l.b16 %v1864
        %v1880 = vunpack.c.l.b16 %v1865
        %v1881 = vunpack.c.l.b16 %v1866
        %v1882 = vpack.c.b16 %v1879, %v1878
        %v1883 = vpack.c.b16 %v1881, %v1880
        %v1887 = vsel %vm735, %v1862, 0
        %1889 = vmatprep.subr.bf16.mxu0 0
        %1890 = vmatpush1.bf16.msra.mxu0 0
        %1891 = vmatprep.subr.bf16.mxu0 0
        %1892 = vmatpush1.bf16.msra.mxu0 0
        %1893 = vmatprep.subr.bf16.mxu0 0
        %1894 = vmatpush1.bf16.msra.mxu0 0
        %1895 = vmatprep.subr.bf16.mxu0 0
        %1896 = vmatpush1.bf16.msra.mxu0 0
        %1897 = vmatprep.subr.bf16.mxu0 0
        %1898 = vmatpush1.bf16.msra.mxu0 0
        %1899 = vmatprep.subr.bf16.mxu0 0
        %1900 = vmatpush1.bf16.msra.mxu0 0
        %1901 = vmatprep.subr.bf16.mxu0 0
        %1902 = vmatpush1.bf16.msra.mxu0 %v1883
        %1903 = vmatprep.subr.bf16.mxu0 0
        %1904 = vmatpush1.bf16.msra.mxu0 %v1882
        %1905 = vmatprep.subr.bf16.mxu0 0
        %1906 = vmatpush2.bf16.msra.mxu0 0
        %1907 = vmatprep.subr.bf16.mxu0 0
        %1908 = vmatpush2.bf16.msra.mxu0 0
        %1909 = vmatprep.subr.bf16.mxu0 0
        %1910 = vmatpush2.bf16.msra.mxu0 0
        %1911 = vmatprep.subr.bf16.mxu0 0
        %1912 = vmatpush2.bf16.msra.mxu0 0
        %1913 = vmatprep.subr.bf16.mxu0 0
        %1914 = vmatpush2.bf16.msra.mxu0 0
        %1915 = vmatprep.subr.bf16.mxu0 0
        %1916 = vmatpush2.bf16.msra.mxu0 0
        %1917 = vmatprep.subr.bf16.mxu0 0
        %1918 = vmatpush2.bf16.msra.mxu0 0
        %1919 = vmatprep.subr.bf16.mxu0 0
        %1920 = vmatpush2.bf16.msra.mxu0 0
        %1921 = vmatprep.mubr.bf16.mxu0 0
        %1922 = vmatmul.mubr.bf16.gmra.mxu0 %v1887
        %v1923 = vpop.f32.mrf.mxu0
        %v1924 = vadd.f32 %v1872, %v1923
        %v1925 = vpop.f32.mrf.mxu0
        %v1926 = vpop.f32.mrf.mxu0
        %v1927 = vpop.f32.mrf.mxu0
        %1928 = vdwg.mxu0
        %v1929 = vadd.f32 %v729, %v1924
        %v1930 = vld [vmem:[%s701] sm:$0x1]
        %v1931 = vld [vmem:[%s704] sm:$0x1]
        %v1932 = vsel %vm735, %v1929, 0.0
        %1933 = vadd.xlane.f32.xlu0 %v1932
        %v1934 = vpop.xlane.xlu0 %1933
        %v1935 = vmul.f32 %v1934, %v739
        %v1936 = vsub.f32 %v1929, %v1935
        %v1937 = vmul.f32 %v1936, %v1936
        %v1938 = vsel %vm735, %v1937, 0.0
        %1939 = vadd.xlane.f32.xlu0 %v1938
        %v1940 = vpop.xlane.xlu0 %1939
        %v1941 = vmul.f32 %v1940, %v739
        %v1942 = vadd.f32 %v1941, 1e-05
        %v1943 = vrsqrt.pop %v1942
        %v1944 = vmul.f32 %v1936, %v1943
        %v1946 = vlaneseq
        %v1947 = vshrl.u32 %v1946, 7
        %v1948 = vsub.s32 0, %v1947
        %v1949 = vrot.slane %v1930, %v1948
        %v1951 = vmul.f32 %v1944, %v1949
        %v1953 = vlaneseq
        %v1954 = vshrl.u32 %v1953, 7
        %v1955 = vsub.s32 0, %v1954
        %v1956 = vrot.slane %v1931, %v1955
        %v1958 = vadd.f32 %v1951, %v1956
        %v1959 = vpack.c.bf16 %v1958, %v1958
        %v1960 = vld [vmem:[%s709] sm:$0xf]
        %v1961 = vld [vmem:[%s709 + $0x4] sm:$0xf]
        %v1962 = vld [vmem:[%s709 + $0x8] sm:$0xf]
        %v1963 = vld [vmem:[%s709 + $0xc] sm:$0xf]
        %v1964 = vld [vmem:[%s712] sm:$0x1]
        %v1966 = vlaneseq
        %v1967 = vshrl.u32 %v1966, 7
        %v1968 = vsub.s32 0, %v1967
        %v1969 = vrot.slane %v1964, %v1968
        %v1975 = vunpack.c.l.b16 %v1960
        %v1976 = vunpack.c.l.b16 %v1961
        %v1977 = vunpack.c.l.b16 %v1962
        %v1978 = vunpack.c.l.b16 %v1963
        %v1979 = vpack.c.b16 %v1976, %v1975
        %v1980 = vpack.c.b16 %v1978, %v1977
        %v1984 = vsel %vm735, %v1959, 0
        %1986 = vmatprep.subr.bf16.mxu0 0
        %1987 = vmatpush1.bf16.msra.mxu0 0
        %1988 = vmatprep.subr.bf16.mxu0 0
        %1989 = vmatpush1.bf16.msra.mxu0 0
        %1990 = vmatprep.subr.bf16.mxu0 0
        %1991 = vmatpush1.bf16.msra.mxu0 0
        %1992 = vmatprep.subr.bf16.mxu0 0
        %1993 = vmatpush1.bf16.msra.mxu0 0
        %1994 = vmatprep.subr.bf16.mxu0 0
        %1995 = vmatpush1.bf16.msra.mxu0 0
        %1996 = vmatprep.subr.bf16.mxu0 0
        %1997 = vmatpush1.bf16.msra.mxu0 0
        %1998 = vmatprep.subr.bf16.mxu0 0
        %1999 = vmatpush1.bf16.msra.mxu0 %v1980
        %2000 = vmatprep.subr.bf16.mxu0 0
        %2001 = vmatpush1.bf16.msra.mxu0 %v1979
        %2002 = vmatprep.subr.bf16.mxu0 0
        %2003 = vmatpush2.bf16.msra.mxu0 0
        %2004 = vmatprep.subr.bf16.mxu0 0
        %2005 = vmatpush2.bf16.msra.mxu0 0
        %2006 = vmatprep.subr.bf16.mxu0 0
        %2007 = vmatpush2.bf16.msra.mxu0 0
        %2008 = vmatprep.subr.bf16.mxu0 0
        %2009 = vmatpush2.bf16.msra.mxu0 0
        %2010 = vmatprep.subr.bf16.mxu0 0
        %2011 = vmatpush2.bf16.msra.mxu0 0
        %2012 = vmatprep.subr.bf16.mxu0 0
        %2013 = vmatpush2.bf16.msra.mxu0 0
        %2014 = vmatprep.subr.bf16.mxu0 0
        %2015 = vmatpush2.bf16.msra.mxu0 0
        %2016 = vmatprep.subr.bf16.mxu0 0
        %2017 = vmatpush2.bf16.msra.mxu0 0
        %2018 = vmatprep.mubr.bf16.mxu0 0
        %2019 = vmatmul.mubr.bf16.gmra.mxu0 %v1984
        %v2020 = vpop.f32.mrf.mxu0
        %v2021 = vadd.f32 %v1969, %v2020
        %v2022 = vpop.f32.mrf.mxu0
        %v2023 = vpop.f32.mrf.mxu0
        %v2024 = vpop.f32.mrf.mxu0
        %2025 = vdwg.mxu0
        %v2026 = vmax.f32 %v2021, 0.0
        %v2027 = vpack.c.bf16 %v2026, %v2026
        %v2028 = vld [vmem:[%s717] sm:$0xf]
        %v2029 = vld [vmem:[%s717 + $0x4] sm:$0xf]
        %v2030 = vld [vmem:[%s717 + $0x8] sm:$0xf]
        %v2031 = vld [vmem:[%s717 + $0xc] sm:$0xf]
        %v2032 = vld [vmem:[%s717 + $0x10] sm:$0xf]
        %v2033 = vld [vmem:[%s717 + $0x14] sm:$0xf]
        %v2034 = vld [vmem:[%s717 + $0x18] sm:$0xf]
        %v2035 = vld [vmem:[%s717 + $0x1c] sm:$0xf]
        %v2036 = vld [vmem:[%s720] sm:$0x1]
        %v2038 = vlaneseq
        %v2039 = vshrl.u32 %v2038, 7
        %v2040 = vsub.s32 0, %v2039
        %v2041 = vrot.slane %v2036, %v2040
        %v2051 = vunpack.c.l.b16 %v2028
        %v2052 = vunpack.c.l.b16 %v2029
        %v2053 = vunpack.c.l.b16 %v2030
        %v2054 = vunpack.c.l.b16 %v2031
        %v2055 = vunpack.c.l.b16 %v2032
        %v2056 = vunpack.c.l.b16 %v2033
        %v2057 = vunpack.c.l.b16 %v2034
        %v2058 = vunpack.c.l.b16 %v2035
        %v2059 = vpack.c.b16 %v2052, %v2051
        %v2060 = vpack.c.b16 %v2054, %v2053
        %v2061 = vpack.c.b16 %v2056, %v2055
        %v2062 = vpack.c.b16 %v2058, %v2057
        %vm2067 = vcmask 523264
        %v2069 = vsel %vm2067, %v2027, 0
        %2071 = vmatprep.subr.bf16.mxu0 0
        %2072 = vmatpush1.bf16.msra.mxu0 0
        %2073 = vmatprep.subr.bf16.mxu0 0
        %2074 = vmatpush1.bf16.msra.mxu0 0
        %2075 = vmatprep.subr.bf16.mxu0 0
        %2076 = vmatpush1.bf16.msra.mxu0 0
        %2077 = vmatprep.subr.bf16.mxu0 0
        %2078 = vmatpush1.bf16.msra.mxu0 0
        %2079 = vmatprep.subr.bf16.mxu0 0
        %2080 = vmatpush1.bf16.msra.mxu0 %v2062
        %2081 = vmatprep.subr.bf16.mxu0 0
        %2082 = vmatpush1.bf16.msra.mxu0 %v2061
        %2083 = vmatprep.subr.bf16.mxu0 0
        %2084 = vmatpush1.bf16.msra.mxu0 %v2060
        %2085 = vmatprep.subr.bf16.mxu0 0
        %2086 = vmatpush1.bf16.msra.mxu0 %v2059
        %2087 = vmatprep.subr.bf16.mxu0 0
        %2088 = vmatpush2.bf16.msra.mxu0 0
        %2089 = vmatprep.subr.bf16.mxu0 0
        %2090 = vmatpush2.bf16.msra.mxu0 0
        %2091 = vmatprep.subr.bf16.mxu0 0
        %2092 = vmatpush2.bf16.msra.mxu0 0
        %2093 = vmatprep.subr.bf16.mxu0 0
        %2094 = vmatpush2.bf16.msra.mxu0 0
        %2095 = vmatprep.subr.bf16.mxu0 0
        %2096 = vmatpush2.bf16.msra.mxu0 0
        %2097 = vmatprep.subr.bf16.mxu0 0
        %2098 = vmatpush2.bf16.msra.mxu0 0
        %2099 = vmatprep.subr.bf16.mxu0 0
        %2100 = vmatpush2.bf16.msra.mxu0 0
        %2101 = vmatprep.subr.bf16.mxu0 0
        %2102 = vmatpush2.bf16.msra.mxu0 0
        %2103 = vmatprep.mubr.bf16.mxu0 0
        %2104 = vmatmul.mubr.bf16.gmra.mxu0 %v2069
        %v2105 = vpop.f32.mrf.mxu0
        %v2106 = vadd.f32 %v2041, %v2105
        %v2107 = vpop.f32.mrf.mxu0
        %v2108 = vpop.f32.mrf.mxu0
        %v2109 = vpop.f32.mrf.mxu0
        %2110 = vdwg.mxu0
        %v2111 = vadd.f32 %v1929, %v2106
        %2112 = vst.msk [vmem:[#allocation2] sm:$0xff] %vm735, %v2111
        %p2113 = scmp.eq.s32.totalorder %s39, 1
        // Predicated region
        $region89: #{tpu_custom_call.1} parent=75 // pred_check
          %p2114 = pneg %p2113
        $region90: #{tpu_custom_call.1} parent=75 // pred_check_branch
          %2116 = sbr.rel (%p2114) target = $region92
        $region91: #{tpu_custom_call.1} parent=75 // pred_region
          %2117 = vst.msk [vmem:[%s676] sm:$0xff] %vm735, %v2111
        $region92: #{tpu_custom_call.1} parent=75 // pred_fallthru
          _
        %s2118 = sand.u32 %s418, 1
        %s2119 = scalar_lea.sflag [#allocation5], %s2118
        %s2120 = sand.u32 %s418, 1
        %s2121 = smul.addr %s2120, 8
        %s2122 = scalar_lea.vmem [#allocation8], %s2121
        // Predicated region
        $region93: #{tpu_custom_call.1} parent=75 // pred_check
          %p2123 = pneg %p428
        $region94: #{tpu_custom_call.1} parent=75 // pred_check_branch
          %2125 = sbr.rel (%p2123) target = $region96
        $region95: #{tpu_custom_call.1} parent=75 // pred_region
          %s2127 = ssub.s32 128, 128
          %2128 = vsyncadd %s2119, %s2127
          %s2129 = smul.addr %s38, 128
          %s2130 = scalar_lea.hbm %s14, %s2129
          %s2132 = sshll.u32 %s2122, 4
          %s2133 = int_to_ptr.vmem [resolvable:$true] %s2132
          %2135 = dma.vmem_to_hbm [thread:$0]  %s2133, 128, %s2130, %s2119
        $region96: #{tpu_custom_call.1} parent=75 // pred_fallthru
          _
      $region76: #{tpu_custom_call.1} parent=5 // pred_fallthru
        _
      %p2136 = scmp.le.s32.totalorder 2, %s29
      // Predicated region
      $region97: #{tpu_custom_call.1} parent=5 // pred_check
        %p2137 = pneg %p2136
      $region98: #{tpu_custom_call.1} parent=5 // pred_check_branch
        %2139 = sbr.rel (%p2137) target = $region100
      $region99: #{tpu_custom_call.1} parent=5 // pred_region
        %s2140 = ssub.s32 %s29, 2
        // Predicated region
        $region101: #{tpu_custom_call.1} parent=99 // pred_check
          %p2141 = pneg %p434
        $region102: #{tpu_custom_call.1} parent=99 // pred_check_branch
          %2143 = sbr.rel (%p2141) target = $region104
        $region103: #{tpu_custom_call.1} parent=99 // pred_region
          %s2144 = sand.u32 %s419, 1
          %s2145 = scalar_lea.sflag [#allocation5], %s2144
          %s2146 = sand.u32 %s419, 1
          %s2147 = smul.addr %s2146, 8
          %s2148 = scalar_lea.vmem [#allocation8], %s2147
          %2149 = dma.done %s2145, 128
        $region104: #{tpu_custom_call.1} parent=99 // pred_fallthru
          _
      $region100: #{tpu_custom_call.1} parent=5 // pred_fallthru
        _
    $region6: #{tpu_custom_call.1} parent=1 // loop_footer
      %s33 = sadd.s32 1, %s29
    $region7: #{tpu_custom_call.1} parent=1 // loop_footer_branch
      %28 = sbr.rel target = $region3
    $region8: #{tpu_custom_call.1} parent=1 // loop_exit
      _
    %2150 = vsyncpa [#allocation4], 1
    %s2151 = scalar_lea.sflag [#allocation4], 1
    %2152 = vsyncpa %s2151, 1
    %2153 = vsyncpa [#allocation7], 1
    %s2154 = scalar_lea.sflag [#allocation7], 1
    %2155 = vsyncpa %s2154, 1
    %2156 = vsyncpa [#allocation5], 1
    %s2157 = scalar_lea.sflag [#allocation5], 1
    %2158 = vsyncpa %s2157, 1

</llo_original>
